<compile_context>
chip_gen: v6e
topology: v6e:2x2x1
jax: 0.10.0
libtpu: 0.0.40
codegen_flags: <defaults>
</compile_context>

<pallas_src>
import math

import jax
import jax.numpy as jnp
from jax.experimental import pallas as pl
from jax.experimental.pallas import tpu as pltpu


_INV_SQRT2 = 0.7071067811865476


def _gelu_exact(x):
    # nn.GELU default (approximate='none'): 0.5 * x * (1 + erf(x / sqrt(2))).
    # Kept in f32: v5e's VPU/EUP have no bf16, and accuracy matters here.
    return 0.5 * x * (1.0 + jax.lax.erf(x * _INV_SQRT2))


def _mlp_kernel_resident(x_ref, w1_ref, b1_ref, w2_ref, b2_ref, o_ref):
    # x_ref : (D_in, TL)   native dtype
    # w1_ref: (H, D_in)    native dtype, VMEM-resident (single-buffered)
    # b1_ref: (H, 1)       native dtype
    # w2_ref: (D_out, H)   native dtype, VMEM-resident
    # b2_ref: (D_out, 1)   native dtype
    h = jnp.dot(w1_ref[...], x_ref[...], preferred_element_type=jnp.float32)
    h = _gelu_exact(h + b1_ref[...].astype(jnp.float32))            # f32 epilogue
    y = jnp.dot(w2_ref[...], h.astype(w2_ref.dtype),
                preferred_element_type=jnp.float32)
    y = y + b2_ref[...].astype(jnp.float32)
    o_ref[...] = y.astype(o_ref.dtype)


def _mlp_kernel_hstream(x_ref, w1_ref, b1_ref, w2_ref, b2_ref, o_ref, acc_ref):
    # Grid = (B, L/TL, H/TH); H axis innermost and "arbitrary".
    # w1_ref: (TH, D_in) slice, b1_ref: (TH, 1) slice, w2_ref: (D_out, TH) slice.
    # acc_ref: (D_out, TL) f32 scratch accumulator (fc2 bias folded into init).
    hi = pl.program_id(2)

    @pl.when(hi == 0)
    def _():
        acc_ref[...] = jnp.broadcast_to(
            b2_ref[...].astype(jnp.float32), acc_ref.shape)

    h = jnp.dot(w1_ref[...], x_ref[...], preferred_element_type=jnp.float32)
    h = _gelu_exact(h + b1_ref[...].astype(jnp.float32))
    acc_ref[...] += jnp.dot(w2_ref[...], h.astype(w2_ref.dtype),
                            preferred_element_type=jnp.float32)

    @pl.when(hi == pl.num_programs(2) - 1)
    def _():
        o_ref[...] = acc_ref[...].astype(o_ref.dtype)


def _vmem_limit_bytes(d_in, h, d_out, tl, th, itemsize):
    """Scoped-VMEM request derived from the kernel's actual residency."""
    f32 = 4
    lane = 128  # (N, 1) bias blocks are lane-padded to (N, 128) in VMEM
    if th == 0:
        params = (h * d_in + d_out * h) * itemsize          # single-buffered weights
        params += (h + d_out) * lane * itemsize             # lane-padded bias blocks
        hidden = h * tl * (f32 + itemsize)                  # f32 h + cast copy
    else:
        params = 2 * (th * d_in + d_out * th) * itemsize    # double-buffered slices
        params += 2 * th * lane * itemsize + d_out * lane * itemsize
        hidden = th * tl * (f32 + itemsize) + d_out * tl * f32   # + accumulator
    io = 2 * d_in * tl * itemsize + 2 * d_out * tl * itemsize    # x / out, 2-deep
    need = params + hidden + io
    # headroom; floor 8 MiB, cap 64 MiB (v7x physical VMEM per TensorCore)
    return int(min(max(int(need * 1.4) + (2 << 20), 8 << 20), 64 << 20))


def mlp_transposed(x, w1, b1, w2, b2, *, tl=512, h_tile=None):
    """Fused transposed MLP (fc1 -> GELU -> fc2).

    x : (B, D_in, L);  w1: (H, D_in), b1: (H,);  w2: (D_out, H), b2: (D_out,)
    tl    : lane tile width on L (rounded to a multiple of 128; 512 is a safe
            default on all chips, 1024 is fine on v6e's 128 MiB VMEM).
    h_tile: None  -> auto (stream H in 128-multiple slices once the weights
                    exceed ~12 MiB, e.g. on v7x's 64 MiB VMEM per TC),
            0     -> force fully VMEM-resident weights,
            int   -> force H-streaming with this tile (multiple of 128, must
                    divide H).
    Params are fed at the input's dtype (bf16 recommended); MXU accumulates f32.
    """
    B, D_in, L = x.shape
    H, d_in_w = w1.shape
    D_out, h_w = w2.shape
    assert d_in_w == D_in and h_w == H
    assert b1.shape == (H,) and b2.shape == (D_out,)

    # Lane-dense L tiles: TL must be a multiple of 128; pad L up if needed
    # (padded columns produce garbage that is sliced off before returning).
    tl = max(128, (int(tl) // 128) * 128)
    n_l = pl.cdiv(L, tl)
    Lp = n_l * tl
    if Lp != L:
        x = jnp.pad(x, ((0, 0), (0, 0), (0, Lp - L)))

    # Native dtype straight into the MXU (no f32 up-cast, no HIGHEST precision).
    pdt = x.dtype
    itemsize = jnp.dtype(pdt).itemsize
    w1p = w1.astype(pdt)
    b1p = b1.astype(pdt).reshape(H, 1)
    w2p = w2.astype(pdt)
    b2p = b2.astype(pdt).reshape(D_out, 1)

    # --- choose the hidden-dim streaming tile -------------------------------
    if h_tile is None:
        resident_bytes = (H * D_in + D_out * H) * itemsize
        th = 0
        if resident_bytes > (12 << 20) and H % 128 == 0:
            th = next((t for t in (512, 256, 128) if H % t == 0), 0)
    elif h_tile and 0 < int(h_tile) < H:
        th = max(128, (int(h_tile) // 128) * 128)
        if H % th != 0:
            th = 0  # TODO(synk): pad H instead of falling back to the resident path.
    else:
        th = 0

    cost = pl.CostEstimate(
        flops=2 * B * Lp * (D_in * H + H * D_out),
        transcendentals=B * H * Lp,
        bytes_accessed=(B * (D_in + D_out) * Lp
                        + H * D_in + D_out * H + H + D_out) * itemsize)
    vmem_limit = _vmem_limit_bytes(D_in, H, D_out, tl, th, itemsize)

    def call(single_buffer_params):
        def spec(shape, index_map, resident=False):
            if resident and single_buffer_params:
                # Constant index_map -> never re-fetched; drop the dead 2nd buffer.
                return pl.BlockSpec(shape, index_map, pipeline_mode=pl.Buffered(1))
            return pl.BlockSpec(shape, index_map)

        if th == 0:
            grid = (B, n_l)
            in_specs = [
                spec((None, D_in, tl), lambda b, l: (b, 0, l)),
                spec((H, D_in), lambda b, l: (0, 0), resident=True),
                spec((H, 1), lambda b, l: (0, 0), resident=True),
                spec((D_out, H), lambda b, l: (0, 0), resident=True),
                spec((D_out, 1), lambda b, l: (0, 0), resident=True),
            ]
            out_specs = spec((None, D_out, tl), lambda b, l: (b, 0, l))
            kernel, scratch = _mlp_kernel_resident, []
            dims = ("parallel", "parallel")
        else:
            grid = (B, n_l, H // th)
            in_specs = [
                spec((None, D_in, tl), lambda b, l, hh: (b, 0, l)),
                spec((th, D_in), lambda b, l, hh: (hh, 0)),
                spec((th, 1), lambda b, l, hh: (hh, 0)),
                spec((D_out, th), lambda b, l, hh: (0, hh)),
                spec((D_out, 1), lambda b, l, hh: (0, 0), resident=True),
            ]
            out_specs = spec((None, D_out, tl), lambda b, l, hh: (b, 0, l))
            kernel = _mlp_kernel_hstream
            scratch = [pltpu.VMEM((D_out, tl), jnp.float32)]
            dims = ("parallel", "parallel", "arbitrary")

        return pl.pallas_call(
            kernel,
            out_shape=jax.ShapeDtypeStruct((B, D_out, Lp), x.dtype),
            grid=grid,
            in_specs=in_specs,
            out_specs=out_specs,
            scratch_shapes=scratch,
            compiler_params=pltpu.CompilerParams(
                dimension_semantics=dims,
                vmem_limit_bytes=vmem_limit),
            cost_estimate=cost,
        )(x, w1p, b1p, w2p, b2p)

    try:
        out = call(single_buffer_params=True)
    except Exception:
        # pipeline_mode=pl.Buffered(1) not available on this JAX version; the
        # default double-buffered resident params are still correct (just more VMEM).
        out = call(single_buffer_params=False)

    if Lp != L:
        out = out[..., :L]
    return out


# --------------------------------------------------------------------------
# pure-JAX reference for sanity checking (exact f32)
# --------------------------------------------------------------------------
def _ref_mlp(x, w1, b1, w2, b2):
    h = jnp.einsum('bul,vu->bvl', x, w1,
                   precision=jax.lax.Precision.HIGHEST) + b1[None, :, None]
    h = _gelu_exact(h)
    y = jnp.einsum('bvl,ov->bol', h, w2,
                   precision=jax.lax.Precision.HIGHEST) + b2[None, :, None]
    return y


if __name__ == "__main__":
    key = jax.random.PRNGKey(0)
    # Small shapes, transposed (B, D, L) layout. H=256 so the H-streaming path
    # (TH=128) can be exercised; L=200 exercises the pad-then-slice path.
    B, D_in, H, D_out, L = 2, 16, 256, 16, 200
    k1, k2, k3, k4, k5 = jax.random.split(key, 5)

    x = jax.random.normal(k1, (B, D_in, L), dtype=jnp.float32)

    # Deterministic init consistent with the module's param shapes / bounds.
    bound1 = 1.0 / math.sqrt(D_in)
    w1 = jax.random.uniform(k2, (H, D_in), minval=-bound1, maxval=bound1,
                            dtype=jnp.float32)
    b1 = jax.random.uniform(k3, (H,), minval=-bound1, maxval=bound1,
                            dtype=jnp.float32)
    bound2 = 1.0 / math.sqrt(H)
    w2 = jax.random.uniform(k4, (D_out, H), minval=-bound2, maxval=bound2,
                            dtype=jnp.float32)
    b2 = jax.random.uniform(k5, (D_out,), minval=-bound2, maxval=bound2,
                            dtype=jnp.float32)

    y_ref = _ref_mlp(x, w1, b1, w2, b2)

    # 1) fully VMEM-resident weights path (f32 inputs, native MXU precision).
    y0 = mlp_transposed(x, w1, b1, w2, b2, tl=128, h_tile=0)
    jax.block_until_ready(y0)
    assert y0.shape == (B, D_out, L)
    err0 = float(jnp.max(jnp.abs(y0 - y_ref)))
    assert err0 < 3e-2, err0

    # 2) H-streaming path (grid over the hidden dim + f32 accumulator scratch).
    y1 = mlp_transposed(x, w1, b1, w2, b2, tl=128, h_tile=128)
    jax.block_until_ready(y1)
    assert y1.shape == (B, D_out, L)
    err1 = float(jnp.max(jnp.abs(y1 - y_ref)))
    assert err1 < 3e-2, err1

    # 3) bf16 end-to-end (the intended production dtype), loose tolerance.
    bf = jnp.bfloat16
    yb = mlp_transposed(x.astype(bf), w1.astype(bf), b1.astype(bf),
                        w2.astype(bf), b2.astype(bf), tl=128, h_tile=128)
    jax.block_until_ready(yb)
    errb = float(jnp.max(jnp.abs(yb.astype(jnp.float32) - y_ref)))
    assert errb < 1e-1, errb

    print("KERNEL_OK")
</pallas_src>

<mosaic_0001>
module attributes {stable_mosaic.version = 11 : i64} {
  func.func @_mlp_kernel_resident(%arg0: i32, %arg1: i32, %arg2: memref<1x16x128xf32, #tpu.memory_space<vmem>>, %arg3: memref<256x16xf32, #tpu.memory_space<vmem>>, %arg4: memref<256x1xf32, #tpu.memory_space<vmem>>, %arg5: memref<16x256xf32, #tpu.memory_space<vmem>>, %arg6: memref<16x1xf32, #tpu.memory_space<vmem>>, %arg7: memref<1x16x128xf32, #tpu.memory_space<vmem>>) attributes {dimension_semantics = [#tpu.dimension_semantics<parallel>, #tpu.dimension_semantics<parallel>], iteration_bounds = array<i64: 2, 2>, scalar_prefetch = 0 : i64, scratch_operands = 0 : i64, tpu.core_type = #tpu.core_type<tc>, window_params = [{transform_indices = @transform_0, window_bounds = array<i64: 1, 16, 128>}, {pipeline_mode = #tpu.pipeline_mode<synchronous>, transform_indices = @transform_1, window_bounds = array<i64: 256, 16>}, {pipeline_mode = #tpu.pipeline_mode<synchronous>, transform_indices = @transform_2, window_bounds = array<i64: 256, 1>}, {pipeline_mode = #tpu.pipeline_mode<synchronous>, transform_indices = @transform_3, window_bounds = array<i64: 16, 256>}, {pipeline_mode = #tpu.pipeline_mode<synchronous>, transform_indices = @transform_4, window_bounds = array<i64: 16, 1>}, {transform_indices = @transform_5, window_bounds = array<i64: 1, 16, 128>}]} {
    %c0 = arith.constant 0 : index
    %c0_0 = arith.constant 0 : index
    %0 = vector.load %arg3[%c0, %c0_0] : memref<256x16xf32, #tpu.memory_space<vmem>>, vector<256x16xf32>
    %c0_1 = arith.constant 0 : index
    %c0_2 = arith.constant 0 : index
    %c0_3 = arith.constant 0 : index
    %1 = vector.load %arg2[%c0_1, %c0_2, %c0_3] : memref<1x16x128xf32, #tpu.memory_space<vmem>>, vector<1x16x128xf32>
    %2 = vector.shape_cast %1 : vector<1x16x128xf32> to vector<16x128xf32>
    %cst = arith.constant dense<0.000000e+00> : vector<256x128xf32>
    %3 = tpu.matmul %0, %2, %cst {dimension_numbers = #tpu.dot_dimension_numbers<[1], [0], [0], [1], [0, 0, 1, 1], [], []>} : vector<256x16xf32>, vector<16x128xf32>, vector<256x128xf32> -> vector<256x128xf32>
    %c0_4 = arith.constant 0 : index
    %c0_5 = arith.constant 0 : index
    %4 = vector.load %arg4[%c0_4, %c0_5] : memref<256x1xf32, #tpu.memory_space<vmem>>, vector<256x1xf32>
    %5 = vector.broadcast %4 : vector<256x1xf32> to vector<256x128xf32>
    %6 = arith.addf %3, %5 : vector<256x128xf32>
    %cst_6 = arith.constant 5.000000e-01 : f32
    %7 = vector.broadcast %cst_6 : f32 to vector<256x128xf32>
    %8 = arith.mulf %7, %6 : vector<256x128xf32>
    %cst_7 = arith.constant 0.707106769 : f32
    %9 = vector.broadcast %cst_7 : f32 to vector<256x128xf32>
    %10 = arith.mulf %6, %9 : vector<256x128xf32>
    %11 = math.erf %10 : vector<256x128xf32>
    %cst_8 = arith.constant 1.000000e+00 : f32
    %12 = vector.broadcast %cst_8 : f32 to vector<256x128xf32>
    %13 = arith.addf %12, %11 : vector<256x128xf32>
    %14 = arith.mulf %8, %13 : vector<256x128xf32>
    %c0_9 = arith.constant 0 : index
    %c0_10 = arith.constant 0 : index
    %15 = vector.load %arg5[%c0_9, %c0_10] : memref<16x256xf32, #tpu.memory_space<vmem>>, vector<16x256xf32>
    %cst_11 = arith.constant dense<0.000000e+00> : vector<16x128xf32>
    %16 = tpu.matmul %15, %14, %cst_11 {dimension_numbers = #tpu.dot_dimension_numbers<[1], [0], [0], [1], [0, 0, 1, 1], [], []>} : vector<16x256xf32>, vector<256x128xf32>, vector<16x128xf32> -> vector<16x128xf32>
    %c0_12 = arith.constant 0 : index
    %c0_13 = arith.constant 0 : index
    %17 = vector.load %arg6[%c0_12, %c0_13] : memref<16x1xf32, #tpu.memory_space<vmem>>, vector<16x1xf32>
    %18 = vector.broadcast %17 : vector<16x1xf32> to vector<16x128xf32>
    %19 = arith.addf %16, %18 : vector<16x128xf32>
    %c0_14 = arith.constant 0 : index
    %c0_15 = arith.constant 0 : index
    %c0_16 = arith.constant 0 : index
    %20 = vector.load %arg7[%c0_14, %c0_15, %c0_16] : memref<1x16x128xf32, #tpu.memory_space<vmem>>, vector<1x16x128xf32>
    %21 = vector.shape_cast %20 : vector<1x16x128xf32> to vector<16x128xf32>
    %22 = vector.shape_cast %19 : vector<16x128xf32> to vector<1x16x128xf32>
    tpu.vector_store %arg7[%c0_14, %c0_15, %c0_16], %22 {strides = array<i32>} : memref<1x16x128xf32, #tpu.memory_space<vmem>>, vector<1x16x128xf32>,
    return
  }
  func.func @transform_0(%arg0: i32, %arg1: i32) -> (i32, i32, i32) {
    %c0_i32 = arith.constant 0 : i32
    %c0_i32_0 = arith.constant 0 : i32
    return %arg0, %c0_i32, %arg1 : i32, i32, i32
  }
  func.func @transform_1(%arg0: i32, %arg1: i32) -> (i32, i32) {
    %c0_i32 = arith.constant 0 : i32
    %c0_i32_0 = arith.constant 0 : i32
    %c0_i32_1 = arith.constant 0 : i32
    return %c0_i32, %c0_i32_0 : i32, i32
  }
  func.func @transform_2(%arg0: i32, %arg1: i32) -> (i32, i32) {
    %c0_i32 = arith.constant 0 : i32
    %c0_i32_0 = arith.constant 0 : i32
    %c0_i32_1 = arith.constant 0 : i32
    return %c0_i32, %c0_i32_0 : i32, i32
  }
  func.func @transform_3(%arg0: i32, %arg1: i32) -> (i32, i32) {
    %c0_i32 = arith.constant 0 : i32
    %c0_i32_0 = arith.constant 0 : i32
    %c0_i32_1 = arith.constant 0 : i32
    return %c0_i32, %c0_i32_0 : i32, i32
  }
  func.func @transform_4(%arg0: i32, %arg1: i32) -> (i32, i32) {
    %c0_i32 = arith.constant 0 : i32
    %c0_i32_0 = arith.constant 0 : i32
    %c0_i32_1 = arith.constant 0 : i32
    return %c0_i32, %c0_i32_0 : i32, i32
  }
  func.func @transform_5(%arg0: i32, %arg1: i32) -> (i32, i32, i32) {
    %c0_i32 = arith.constant 0 : i32
    %c0_i32_0 = arith.constant 0 : i32
    return %arg0, %c0_i32, %arg1 : i32, i32, i32
  }
}

module attributes {stable_mosaic.version = 11 : i64} {
  func.func @_mlp_kernel_resident(%arg0: i32, %arg1: i32, %arg2: memref<1x16x128xf32, #tpu.memory_space<vmem>>, %arg3: memref<256x16xf32, #tpu.memory_space<vmem>>, %arg4: memref<256x1xf32, #tpu.memory_space<vmem>>, %arg5: memref<16x256xf32, #tpu.memory_space<vmem>>, %arg6: memref<16x1xf32, #tpu.memory_space<vmem>>, %arg7: memref<1x16x128xf32, #tpu.memory_space<vmem>>) attributes {dimension_semantics = [#tpu.dimension_semantics<parallel>, #tpu.dimension_semantics<parallel>], iteration_bounds = array<i64: 2, 2>, scalar_prefetch = 0 : i64, scratch_operands = 0 : i64, tpu.core_type = #tpu.core_type<tc>, window_params = [{transform_indices = @transform_0, window_bounds = array<i64: 1, 16, 128>}, {pipeline_mode = #tpu.pipeline_mode<synchronous>, transform_indices = @transform_1, window_bounds = array<i64: 256, 16>}, {pipeline_mode = #tpu.pipeline_mode<synchronous>, transform_indices = @transform_2, window_bounds = array<i64: 256, 1>}, {pipeline_mode = #tpu.pipeline_mode<synchronous>, transform_indices = @transform_3, window_bounds = array<i64: 16, 256>}, {pipeline_mode = #tpu.pipeline_mode<synchronous>, transform_indices = @transform_4, window_bounds = array<i64: 16, 1>}, {transform_indices = @transform_5, window_bounds = array<i64: 1, 16, 128>}]} {
    %c0 = arith.constant 0 : index
    %c0_0 = arith.constant 0 : index
    %0 = vector.load %arg3[%c0, %c0_0] : memref<256x16xf32, #tpu.memory_space<vmem>>, vector<256x16xf32>
    %c0_1 = arith.constant 0 : index
    %c0_2 = arith.constant 0 : index
    %c0_3 = arith.constant 0 : index
    %1 = vector.load %arg2[%c0_1, %c0_2, %c0_3] : memref<1x16x128xf32, #tpu.memory_space<vmem>>, vector<1x16x128xf32>
    %2 = vector.shape_cast %1 : vector<1x16x128xf32> to vector<16x128xf32>
    %cst = arith.constant dense<0.000000e+00> : vector<256x128xf32>
    %3 = tpu.matmul %0, %2, %cst {dimension_numbers = #tpu.dot_dimension_numbers<[1], [0], [0], [1], [0, 0, 1, 1], [], []>} : vector<256x16xf32>, vector<16x128xf32>, vector<256x128xf32> -> vector<256x128xf32>
    %c0_4 = arith.constant 0 : index
    %c0_5 = arith.constant 0 : index
    %4 = vector.load %arg4[%c0_4, %c0_5] : memref<256x1xf32, #tpu.memory_space<vmem>>, vector<256x1xf32>
    %5 = vector.broadcast %4 : vector<256x1xf32> to vector<256x128xf32>
    %6 = arith.addf %3, %5 : vector<256x128xf32>
    %cst_6 = arith.constant 5.000000e-01 : f32
    %7 = vector.broadcast %cst_6 : f32 to vector<256x128xf32>
    %8 = arith.mulf %7, %6 : vector<256x128xf32>
    %cst_7 = arith.constant 0.707106769 : f32
    %9 = vector.broadcast %cst_7 : f32 to vector<256x128xf32>
    %10 = arith.mulf %6, %9 : vector<256x128xf32>
    %11 = math.erf %10 : vector<256x128xf32>
    %cst_8 = arith.constant 1.000000e+00 : f32
    %12 = vector.broadcast %cst_8 : f32 to vector<256x128xf32>
    %13 = arith.addf %12, %11 : vector<256x128xf32>
    %14 = arith.mulf %8, %13 : vector<256x128xf32>
    %c0_9 = arith.constant 0 : index
    %c0_10 = arith.constant 0 : index
    %15 = vector.load %arg5[%c0_9, %c0_10] : memref<16x256xf32, #tpu.memory_space<vmem>>, vector<16x256xf32>
    %cst_11 = arith.constant dense<0.000000e+00> : vector<16x128xf32>
    %16 = tpu.matmul %15, %14, %cst_11 {dimension_numbers = #tpu.dot_dimension_numbers<[1], [0], [0], [1], [0, 0, 1, 1], [], []>} : vector<16x256xf32>, vector<256x128xf32>, vector<16x128xf32> -> vector<16x128xf32>
    %c0_12 = arith.constant 0 : index
    %c0_13 = arith.constant 0 : index
    %17 = vector.load %arg6[%c0_12, %c0_13] : memref<16x1xf32, #tpu.memory_space<vmem>>, vector<16x1xf32>
    %18 = vector.broadcast %17 : vector<16x1xf32> to vector<16x128xf32>
    %19 = arith.addf %16, %18 : vector<16x128xf32>
    %c0_14 = arith.constant 0 : index
    %c0_15 = arith.constant 0 : index
    %c0_16 = arith.constant 0 : index
    %20 = vector.load %arg7[%c0_14, %c0_15, %c0_16] : memref<1x16x128xf32, #tpu.memory_space<vmem>>, vector<1x16x128xf32>
    %21 = vector.shape_cast %20 : vector<1x16x128xf32> to vector<16x128xf32>
    %22 = vector.shape_cast %19 : vector<16x128xf32> to vector<1x16x128xf32>
    tpu.vector_store %arg7[%c0_14, %c0_15, %c0_16], %22 {strides = array<i32>} : memref<1x16x128xf32, #tpu.memory_space<vmem>>, vector<1x16x128xf32>,
    return
  }
  func.func @transform_0(%arg0: i32, %arg1: i32) -> (i32, i32, i32) {
    %c0_i32 = arith.constant 0 : i32
    %c0_i32_0 = arith.constant 0 : i32
    return %arg0, %c0_i32, %arg1 : i32, i32, i32
  }
  func.func @transform_1(%arg0: i32, %arg1: i32) -> (i32, i32) {
    %c0_i32 = arith.constant 0 : i32
    %c0_i32_0 = arith.constant 0 : i32
    %c0_i32_1 = arith.constant 0 : i32
    return %c0_i32, %c0_i32_0 : i32, i32
  }
  func.func @transform_2(%arg0: i32, %arg1: i32) -> (i32, i32) {
    %c0_i32 = arith.constant 0 : i32
    %c0_i32_0 = arith.constant 0 : i32
    %c0_i32_1 = arith.constant 0 : i32
    return %c0_i32, %c0_i32_0 : i32, i32
  }
  func.func @transform_3(%arg0: i32, %arg1: i32) -> (i32, i32) {
    %c0_i32 = arith.constant 0 : i32
    %c0_i32_0 = arith.constant 0 : i32
    %c0_i32_1 = arith.constant 0 : i32
    return %c0_i32, %c0_i32_0 : i32, i32
  }
  func.func @transform_4(%arg0: i32, %arg1: i32) -> (i32, i32) {
    %c0_i32 = arith.constant 0 : i32
    %c0_i32_0 = arith.constant 0 : i32
    %c0_i32_1 = arith.constant 0 : i32
    return %c0_i32, %c0_i32_0 : i32, i32
  }
  func.func @transform_5(%arg0: i32, %arg1: i32) -> (i32, i32, i32) {
    %c0_i32 = arith.constant 0 : i32
    %c0_i32_0 = arith.constant 0 : i32
    return %arg0, %c0_i32, %arg1 : i32, i32, i32
  }
}

</mosaic_0001>

<llo_original>
// kernel: tpu_custom_call.1
$region0: #{tpu_custom_call.1}
  #allocation0 [shape = 'u32[]', space=smem, size = 0x4, offset = 0x4, fixed_abs, tag = 'smem constant byte address 0x4 - core index']
  #allocation1 [shape = 'u32[144,128]{1,0:T(1,128)}', space=vmem, size = 0x12000, scoped, tag = 'internal scratch']
  %s0 = inlined_call_operand.vmem [shape: f32[2,16,256], index: 0, kind: input, shape index: {}]
  %s1 = inlined_call_operand.vmem [shape: f32[256,16], index: 1, kind: input, shape index: {}]
  %s2 = inlined_call_operand.vmem [shape: f32[256,1], index: 2, kind: input, shape index: {}]
  %s3 = inlined_call_operand.vmem [shape: f32[16,256], index: 3, kind: input, shape index: {}]
  %s4 = inlined_call_operand.vmem [shape: f32[16,1], index: 4, kind: input, shape index: {}]
  %s5 = inlined_call_operand.hbm [shape: f32[2,16,256], index: 5, kind: output, shape index: {}]
  %s6 = sld [smem:[#allocation0]]
  $region91: #{tpu_custom_call.1} parent=0
    _
  %s8 = ssub.s32 1, %s6
  %s9 = scalar_select 0, %s8, %s6
  $region1: #{tpu_custom_call.1} parent=0
    #allocation2 [shape = 'u8[16384]{0}', space=vmem, size = 0x4000, scoped, tag = 'input window, operand 0']
    #allocation3 [shape = 'u8[16384]{0}', space=vmem, size = 0x4000, scoped, tag = 'output window, operand 0']
    #allocation4 [shape = 's32[2]{0}', space=sflag, size = 0x8, scoped, tag = 'scoped memory for tpu_custom_call.1']
    %10 = vsyncpa [#allocation4], 0
    %s11 = scalar_lea.sflag [#allocation4], 1
    %12 = vsyncpa %s11, 0
    loop: start=0, step=1, limit=6
    $region2: #{tpu_custom_call.1} parent=1 // loop_pre_header
      _
    $region3: #{tpu_custom_call.1} parent=1 // loop_header
      %s14 = sphi 0, %s18
      %p15 = scmp.ge.s32.totalorder %s14, 6
      %s21 = sphi 0, %s33
      %s22 = sphi 0, %s29
      %s23 = sphi 0, %s21
      %s24 = sphi 0, %s22
      %s25 = sphi 0, %s23
      %s26 = sphi 0, %s24
      %s38 = sphi 0, %s40
      %s41 = sphi 0, %s38
      %s42 = sphi 0, %s41
      %s58 = sphi 0, %s42
      %s62 = sphi 0, %s62
      %s64 = sphi 0, %s62
      %s65 = sphi 0, %s64
      %s79 = sphi 0, %s65
      %s83 = sphi 0, %s83
      %s85 = sphi 0, %s83
      %s86 = sphi 0, %s85
      %s100 = sphi 0, %s86
      %s104 = sphi 0, %s104
      %s106 = sphi 0, %s104
      %s107 = sphi 0, %s106
      %s121 = sphi 0, %s107
      %s125 = sphi 0, %s125
      %s127 = sphi 0, %s125
      %s128 = sphi 0, %s127
      %s142 = sphi 0, %s128
      %s150 = sphi 0, %s152
      %s153 = sphi 0, %s150
      %s154 = sphi 0, %s153
      %s170 = sphi 0, %s154
    $region4: #{tpu_custom_call.1} parent=1 // loop_header_branch
      %17 = sbr.rel (%p15) target = $region8
    $region5: #{tpu_custom_call.1} parent=1 // loop_body
      %s19 = ssub.s32 %s14, 1
      %s20 = ssub.s32 %s14, 2
      %s27 = sadd.s32 1, %s22
      %p28 = scmp.ge.s32.totalorder %s27, 2
      %s29 = scalar_select %p28, 0, %s27
      %s30 = sadd.s32 1, %s21
      %s31 = scalar_select %p28, %s30, %s21
      %p32 = scmp.ge.s32.totalorder %s31, 2
      %s33 = scalar_select %p32, 0, %s31
      %s34 = ssub.s32 %s21, %s33
      %s35 = ssub.s32 %s22, %s29
      %s36 = sor.u32 %s34, %s35
      %p37 = scmp.eq.s32.totalorder %s36, 0
      %s39 = sadd.s32 %s38, 1
      %s40 = scalar_select %p37, %s38, %s39
      %p43 = pneg %p37
      %p44 = scmp.eq.s32.totalorder %s14, 3
      %p45 = por %p43, %p44
      %p46 = scmp.ne.s32.totalorder %s38, %s41
      %p47 = scmp.eq.s32.totalorder %s14, 0
      %p48 = por %p46, %p47
      %p49 = scmp.ne.s32.totalorder %s38, %s41
      %p50 = scmp.eq.s32.totalorder %s19, 3
      %p51 = por %p49, %p50
      %p52 = scmp.ne.s32.totalorder %s41, %s42
      %p53 = scmp.eq.s32.totalorder %s19, 0
      %p54 = por %p52, %p53
      %p55 = scmp.ne.s32.totalorder %s41, %s42
      %p56 = scmp.eq.s32.totalorder %s20, 3
      %p57 = por %p55, %p56
      %p59 = scmp.ne.s32.totalorder %s42, %s58
      %p60 = scmp.eq.s32.totalorder %s20, 0
      %p61 = por %p59, %p60
      %s63 = sadd.s32 %s62, 1
      %p66 = scmp.eq.s32.totalorder %s14, 3
      %p67 = scmp.ne.s32.totalorder %s62, %s64
      %p68 = scmp.eq.s32.totalorder %s14, 0
      %p69 = por %p67, %p68
      %p70 = scmp.ne.s32.totalorder %s62, %s64
      %p71 = scmp.eq.s32.totalorder %s19, 3
      %p72 = por %p70, %p71
      %p73 = scmp.ne.s32.totalorder %s64, %s65
      %p74 = scmp.eq.s32.totalorder %s19, 0
      %p75 = por %p73, %p74
      %p76 = scmp.ne.s32.totalorder %s64, %s65
      %p77 = scmp.eq.s32.totalorder %s20, 3
      %p78 = por %p76, %p77
      %p80 = scmp.ne.s32.totalorder %s65, %s79
      %p81 = scmp.eq.s32.totalorder %s20, 0
      %p82 = por %p80, %p81
      %s84 = sadd.s32 %s83, 1
      %p87 = scmp.eq.s32.totalorder %s14, 3
      %p88 = scmp.ne.s32.totalorder %s83, %s85
      %p89 = scmp.eq.s32.totalorder %s14, 0
      %p90 = por %p88, %p89
      %p91 = scmp.ne.s32.totalorder %s83, %s85
      %p92 = scmp.eq.s32.totalorder %s19, 3
      %p93 = por %p91, %p92
      %p94 = scmp.ne.s32.totalorder %s85, %s86
      %p95 = scmp.eq.s32.totalorder %s19, 0
      %p96 = por %p94, %p95
      %p97 = scmp.ne.s32.totalorder %s85, %s86
      %p98 = scmp.eq.s32.totalorder %s20, 3
      %p99 = por %p97, %p98
      %p101 = scmp.ne.s32.totalorder %s86, %s100
      %p102 = scmp.eq.s32.totalorder %s20, 0
      %p103 = por %p101, %p102
      %s105 = sadd.s32 %s104, 1
      %p108 = scmp.eq.s32.totalorder %s14, 3
      %p109 = scmp.ne.s32.totalorder %s104, %s106
      %p110 = scmp.eq.s32.totalorder %s14, 0
      %p111 = por %p109, %p110
      %p112 = scmp.ne.s32.totalorder %s104, %s106
      %p113 = scmp.eq.s32.totalorder %s19, 3
      %p114 = por %p112, %p113
      %p115 = scmp.ne.s32.totalorder %s106, %s107
      %p116 = scmp.eq.s32.totalorder %s19, 0
      %p117 = por %p115, %p116
      %p118 = scmp.ne.s32.totalorder %s106, %s107
      %p119 = scmp.eq.s32.totalorder %s20, 3
      %p120 = por %p118, %p119
      %p122 = scmp.ne.s32.totalorder %s107, %s121
      %p123 = scmp.eq.s32.totalorder %s20, 0
      %p124 = por %p122, %p123
      %s126 = sadd.s32 %s125, 1
      %p129 = scmp.eq.s32.totalorder %s14, 3
      %p130 = scmp.ne.s32.totalorder %s125, %s127
      %p131 = scmp.eq.s32.totalorder %s14, 0
      %p132 = por %p130, %p131
      %p133 = scmp.ne.s32.totalorder %s125, %s127
      %p134 = scmp.eq.s32.totalorder %s19, 3
      %p135 = por %p133, %p134
      %p136 = scmp.ne.s32.totalorder %s127, %s128
      %p137 = scmp.eq.s32.totalorder %s19, 0
      %p138 = por %p136, %p137
      %p139 = scmp.ne.s32.totalorder %s127, %s128
      %p140 = scmp.eq.s32.totalorder %s20, 3
      %p141 = por %p139, %p140
      %p143 = scmp.ne.s32.totalorder %s128, %s142
      %p144 = scmp.eq.s32.totalorder %s20, 0
      %p145 = por %p143, %p144
      %s146 = ssub.s32 %s21, %s33
      %s147 = ssub.s32 %s22, %s29
      %s148 = sor.u32 %s146, %s147
      %p149 = scmp.eq.s32.totalorder %s148, 0
      %s151 = sadd.s32 %s150, 1
      %s152 = scalar_select %p149, %s150, %s151
      %p155 = pneg %p149
      %p156 = scmp.eq.s32.totalorder %s14, 3
      %p157 = por %p155, %p156
      %p158 = scmp.ne.s32.totalorder %s150, %s153
      %p159 = scmp.eq.s32.totalorder %s14, 0
      %p160 = por %p158, %p159
      %p161 = scmp.ne.s32.totalorder %s150, %s153
      %p162 = scmp.eq.s32.totalorder %s19, 3
      %p163 = por %p161, %p162
      %p164 = scmp.ne.s32.totalorder %s153, %s154
      %p165 = scmp.eq.s32.totalorder %s19, 0
      %p166 = por %p164, %p165
      %p167 = scmp.ne.s32.totalorder %s153, %s154
      %p168 = scmp.eq.s32.totalorder %s20, 3
      %p169 = por %p167, %p168
      %p171 = scmp.ne.s32.totalorder %s154, %s170
      %p172 = scmp.eq.s32.totalorder %s20, 0
      %p173 = por %p171, %p172
      %p174 = scmp.le.s32.totalorder 1, %s14
      %p175 = scmp.lt.s32.totalorder %s14, 5
      %p176 = pnand %p174, %p175
      %p177 = pneg %p176
      // Predicated region
      $region9: #{tpu_custom_call.1} parent=5 // pred_check
        _
      $region10: #{tpu_custom_call.1} parent=5 // pred_check_branch
        %179 = sbr.rel (%p176) target = $region12
      $region11: #{tpu_custom_call.1} parent=5 // pred_region
        %s180 = ssub.s32 %s14, 1
        // Predicated region
        $region13: #{tpu_custom_call.1} parent=11 // pred_check
          %p181 = pneg %p75
        $region14: #{tpu_custom_call.1} parent=11 // pred_check_branch
          %183 = sbr.rel (%p181) target = $region16
        $region15: #{tpu_custom_call.1} parent=11 // pred_region
          _
        $region16: #{tpu_custom_call.1} parent=11 // pred_fallthru
          _
        // Predicated region
        $region17: #{tpu_custom_call.1} parent=11 // pred_check
          %p184 = pneg %p96
        $region18: #{tpu_custom_call.1} parent=11 // pred_check_branch
          %186 = sbr.rel (%p184) target = $region20
        $region19: #{tpu_custom_call.1} parent=11 // pred_region
          _
        $region20: #{tpu_custom_call.1} parent=11 // pred_fallthru
          _
        // Predicated region
        $region21: #{tpu_custom_call.1} parent=11 // pred_check
          %p187 = pneg %p117
        $region22: #{tpu_custom_call.1} parent=11 // pred_check_branch
          %189 = sbr.rel (%p187) target = $region24
        $region23: #{tpu_custom_call.1} parent=11 // pred_region
          _
        $region24: #{tpu_custom_call.1} parent=11 // pred_fallthru
          _
        // Predicated region
        $region25: #{tpu_custom_call.1} parent=11 // pred_check
          %p190 = pneg %p138
        $region26: #{tpu_custom_call.1} parent=11 // pred_check_branch
          %192 = sbr.rel (%p190) target = $region28
        $region27: #{tpu_custom_call.1} parent=11 // pred_region
          _
        $region28: #{tpu_custom_call.1} parent=11 // pred_fallthru
          _
      $region12: #{tpu_custom_call.1} parent=5 // pred_fallthru
        _
      %p193 = scmp.lt.s32.totalorder %s14, 4
      // Predicated region
      $region29: #{tpu_custom_call.1} parent=5 // pred_check
        %p194 = pneg %p193
      $region30: #{tpu_custom_call.1} parent=5 // pred_check_branch
        %196 = sbr.rel (%p194) target = $region32
      $region31: #{tpu_custom_call.1} parent=5 // pred_region
        // Predicated region
        $region33: #{tpu_custom_call.1} parent=31 // pred_check
          %p197 = pneg %p48
        $region34: #{tpu_custom_call.1} parent=31 // pred_check_branch
          %199 = sbr.rel (%p197) target = $region36
        $region35: #{tpu_custom_call.1} parent=31 // pred_region
          %s200 = sand.u32 %s38, 1
          %s201 = sand.u32 %s38, 1
          %s202 = smul.addr %s201, 16
          %s203 = scalar_lea.vmem [#allocation2], %s202
          %s204 = smul.addr %s21, 4
          %s205 = sadd.s32 %s22, %s204
          %s206 = smul.addr %s205, 8
          %s207 = scalar_lea.vmem %s0, %s206
          // Predicated region
          $region37: #{tpu_custom_call.1} parent=35 // pred_check
            _
          $region38: #{tpu_custom_call.1} parent=35 // pred_check_branch
            %209 = sbr.rel (0) target = $region40
          $region39: #{tpu_custom_call.1} parent=35 // pred_region
            // Predicated region
            $region41: #{tpu_custom_call.1} parent=39 // pred_check
              _
            $region42: #{tpu_custom_call.1} parent=39 // pred_check_branch
              %211 = sbr.rel (0) target = $region44
            $region43: #{tpu_custom_call.1} parent=39 // pred_region
              // Predicated region
              $region56: #{tpu_custom_call.1} parent=43 // pred_check
                _
              $region57: #{tpu_custom_call.1} parent=43 // pred_check_branch
                %229 = sbr.rel (0) target = $region59
              $region58: #{tpu_custom_call.1} parent=43 // pred_region
                loop: start=0, step=1, limit=1
                $region60: #{tpu_custom_call.1} parent=58 // loop_pre_header
                  _
                $region61: #{tpu_custom_call.1} parent=58 // loop_header
                  %s231 = sphi 0, %s235
                  %p232 = scmp.ge.s32.totalorder %s231, 1
                  %s236 = sphi %s207, %s207
                  %s237 = sphi %s203, %s203
                $region62: #{tpu_custom_call.1} parent=58 // loop_header_branch
                  %234 = sbr.rel (%p232) target = $region66
                $region63: #{tpu_custom_call.1} parent=58 // loop_body
                  %v238 = vld [vmem:[%s236] sm:$0xff]
                  %239 = vst [vmem:[%s237] sm:$0xff] %v238
                  %v240 = vld [vmem:[%s236 + $0x10] sm:$0xff]
                  %241 = vst [vmem:[%s237 + $0x8] sm:$0xff] %v240
                $region64: #{tpu_custom_call.1} parent=58 // loop_footer
                  %s235 = sadd.s32 1, %s231
                $region65: #{tpu_custom_call.1} parent=58 // loop_footer_branch
                  %230 = sbr.rel target = $region61
                $region66: #{tpu_custom_call.1} parent=58 // loop_exit
                  _
              $region59: #{tpu_custom_call.1} parent=43 // pred_fallthru
                _
              // Predicated region
              $region67: #{tpu_custom_call.1} parent=43 // pred_check
                _
              $region68: #{tpu_custom_call.1} parent=43 // pred_check_branch
                %243 = sbr.rel target = $region70
              $region69: #{tpu_custom_call.1} parent=43 // pred_region
                _
              $region70: #{tpu_custom_call.1} parent=43 // pred_fallthru
                _
            $region44: #{tpu_custom_call.1} parent=39 // pred_fallthru
              _
            // Predicated region
            $region45: #{tpu_custom_call.1} parent=39 // pred_check
              _
            $region46: #{tpu_custom_call.1} parent=39 // pred_check_branch
              %213 = sbr.rel target = $region48
            $region47: #{tpu_custom_call.1} parent=39 // pred_region
              %s215 = ssub.s32 256, 1
              loop: start=0, step=1, limit=1
              $region49: #{tpu_custom_call.1} parent=47 // loop_pre_header
                _
              $region50: #{tpu_custom_call.1} parent=47 // loop_header
                %s217 = sphi 0, %s221
                %p218 = scmp.ge.s32.totalorder %s217, 1
                %s222 = sphi %s207, %s207
                %s223 = sphi %s203, %s203
              $region51: #{tpu_custom_call.1} parent=47 // loop_header_branch
                %220 = sbr.rel (%p218) target = $region55
              $region52: #{tpu_custom_call.1} parent=47 // loop_body
                %v224 = vld [vmem:[%s222] sm:%s215]
                %225 = vst [vmem:[%s223] sm:%s215] %v224
                %v226 = vld [vmem:[%s222 + $0x10] sm:%s215]
                %227 = vst [vmem:[%s223 + $0x8] sm:%s215] %v226
              $region53: #{tpu_custom_call.1} parent=47 // loop_footer
                %s221 = sadd.s32 1, %s217
              $region54: #{tpu_custom_call.1} parent=47 // loop_footer_branch
                %216 = sbr.rel target = $region50
              $region55: #{tpu_custom_call.1} parent=47 // loop_exit
                _
            $region48: #{tpu_custom_call.1} parent=39 // pred_fallthru
              _
          $region40: #{tpu_custom_call.1} parent=35 // pred_fallthru
            _
          %244 = vnop
        $region36: #{tpu_custom_call.1} parent=31 // pred_fallthru
          _
      $region32: #{tpu_custom_call.1} parent=5 // pred_fallthru
        _
      %p245 = scmp.le.s32.totalorder 1, %s14
      %p246 = scmp.lt.s32.totalorder %s14, 5
      %p247 = pnand %p245, %p246
      %p248 = pneg %p247
      // Predicated region
      $region71: #{tpu_custom_call.1} parent=5 // pred_check
        _
      $region72: #{tpu_custom_call.1} parent=5 // pred_check_branch
        %250 = sbr.rel (%p247) target = $region74
      $region73: #{tpu_custom_call.1} parent=5 // pred_region
        %s251 = ssub.s32 %s14, 1
        %s252 = sand.u32 %s41, 1
        %s253 = sand.u32 %s41, 1
        %s254 = smul.addr %s253, 16
        %s255 = scalar_lea.vmem [#allocation2], %s254
        // Predicated region
        $region75: #{tpu_custom_call.1} parent=73 // pred_check
          %p256 = pneg %p54
        $region76: #{tpu_custom_call.1} parent=73 // pred_check_branch
          %258 = sbr.rel (%p256) target = $region78
        $region77: #{tpu_custom_call.1} parent=73 // pred_region
          _
        $region78: #{tpu_custom_call.1} parent=73 // pred_fallthru
          _
        %s259 = sand.u32 %s41, 1
        %s260 = sand.u32 %s41, 1
        %s261 = smul.addr %s260, 16
        %s262 = scalar_lea.vmem [#allocation2], %s261
        %p263 = pneg %p54
        %p264 = pneg %p51
        %p265 = pneg %p75
        %p266 = pneg %p72
        %p267 = pneg %p96
        %p268 = pneg %p93
        %p269 = pneg %p117
        %p270 = pneg %p114
        %p271 = pneg %p138
        %p272 = pneg %p135
        %p273 = pneg %p166
        %p274 = pneg %p163
        %s275 = sand.u32 %s153, 1
        %s276 = scalar_lea.sflag [#allocation4], %s275
        %s277 = sand.u32 %s153, 1
        %s278 = smul.addr %s277, 16
        %s279 = scalar_lea.vmem [#allocation3], %s278
        %v280 = vld [vmem:[%s1] sm:$0xff]
        %v281 = vld [vmem:[%s1 + $0x8] sm:$0xff]
        %v282 = vld [vmem:[%s1 + $0x10] sm:$0xff]
        %v283 = vld [vmem:[%s1 + $0x18] sm:$0xff]
        %v284 = vld [vmem:[%s1 + $0x20] sm:$0xff]
        %v285 = vld [vmem:[%s1 + $0x28] sm:$0xff]
        %v286 = vld [vmem:[%s1 + $0x30] sm:$0xff]
        %v287 = vld [vmem:[%s1 + $0x38] sm:$0xff]
        %v288 = vld [vmem:[%s1 + $0x40] sm:$0xff]
        %v289 = vld [vmem:[%s1 + $0x48] sm:$0xff]
        %v290 = vld [vmem:[%s1 + $0x50] sm:$0xff]
        %v291 = vld [vmem:[%s1 + $0x58] sm:$0xff]
        %v292 = vld [vmem:[%s1 + $0x60] sm:$0xff]
        %v293 = vld [vmem:[%s1 + $0x68] sm:$0xff]
        %v294 = vld [vmem:[%s1 + $0x70] sm:$0xff]
        %v295 = vld [vmem:[%s1 + $0x78] sm:$0xff]
        %v296 = vld [vmem:[%s1 + $0x80] sm:$0xff]
        %v297 = vld [vmem:[%s1 + $0x88] sm:$0xff]
        %v298 = vld [vmem:[%s1 + $0x90] sm:$0xff]
        %v299 = vld [vmem:[%s1 + $0x98] sm:$0xff]
        %v300 = vld [vmem:[%s1 + $0xa0] sm:$0xff]
        %v301 = vld [vmem:[%s1 + $0xa8] sm:$0xff]
        %v302 = vld [vmem:[%s1 + $0xb0] sm:$0xff]
        %v303 = vld [vmem:[%s1 + $0xb8] sm:$0xff]
        %v304 = vld [vmem:[%s1 + $0xc0] sm:$0xff]
        %v305 = vld [vmem:[%s1 + $0xc8] sm:$0xff]
        %v306 = vld [vmem:[%s1 + $0xd0] sm:$0xff]
        %v307 = vld [vmem:[%s1 + $0xd8] sm:$0xff]
        %v308 = vld [vmem:[%s1 + $0xe0] sm:$0xff]
        %v309 = vld [vmem:[%s1 + $0xe8] sm:$0xff]
        %v310 = vld [vmem:[%s1 + $0xf0] sm:$0xff]
        %v311 = vld [vmem:[%s1 + $0xf8] sm:$0xff]
        %v312 = vld [vmem:[%s255] sm:$0xff]
        %v313 = vld [vmem:[%s255 + $0x8] sm:$0xff]
        %v314 = vld [vmem:[%s2] sm:$0xff]
        %v315 = vld [vmem:[%s2 + $0x8] sm:$0xff]
        %v316 = vld [vmem:[%s2 + $0x10] sm:$0xff]
        %v317 = vld [vmem:[%s2 + $0x18] sm:$0xff]
        %v318 = vld [vmem:[%s2 + $0x20] sm:$0xff]
        %v319 = vld [vmem:[%s2 + $0x28] sm:$0xff]
        %v320 = vld [vmem:[%s2 + $0x30] sm:$0xff]
        %v321 = vld [vmem:[%s2 + $0x38] sm:$0xff]
        %v322 = vld [vmem:[%s2 + $0x40] sm:$0xff]
        %v323 = vld [vmem:[%s2 + $0x48] sm:$0xff]
        %v324 = vld [vmem:[%s2 + $0x50] sm:$0xff]
        %v325 = vld [vmem:[%s2 + $0x58] sm:$0xff]
        %v326 = vld [vmem:[%s2 + $0x60] sm:$0xff]
        %v327 = vld [vmem:[%s2 + $0x68] sm:$0xff]
        %v328 = vld [vmem:[%s2 + $0x70] sm:$0xff]
        %v329 = vld [vmem:[%s2 + $0x78] sm:$0xff]
        %v330 = vld [vmem:[%s2 + $0x80] sm:$0xff]
        %v331 = vld [vmem:[%s2 + $0x88] sm:$0xff]
        %v332 = vld [vmem:[%s2 + $0x90] sm:$0xff]
        %v333 = vld [vmem:[%s2 + $0x98] sm:$0xff]
        %v334 = vld [vmem:[%s2 + $0xa0] sm:$0xff]
        %v335 = vld [vmem:[%s2 + $0xa8] sm:$0xff]
        %v336 = vld [vmem:[%s2 + $0xb0] sm:$0xff]
        %v337 = vld [vmem:[%s2 + $0xb8] sm:$0xff]
        %v338 = vld [vmem:[%s2 + $0xc0] sm:$0xff]
        %v339 = vld [vmem:[%s2 + $0xc8] sm:$0xff]
        %v340 = vld [vmem:[%s2 + $0xd0] sm:$0xff]
        %v341 = vld [vmem:[%s2 + $0xd8] sm:$0xff]
        %v342 = vld [vmem:[%s2 + $0xe0] sm:$0xff]
        %v343 = vld [vmem:[%s2 + $0xe8] sm:$0xff]
        %v344 = vld [vmem:[%s2 + $0xf0] sm:$0xff]
        %v345 = vld [vmem:[%s2 + $0xf8] sm:$0xff]
        %347 = vset.pattern.permute.xlu0 0
        %348 = vperm.xlu0 %347, %v314
        %v349 = vpop.permute.xlu0 %348
        %352 = vset.pattern.permute.xlu0 0
        %353 = vperm.xlu0 %352, %v315
        %v354 = vpop.permute.xlu0 %353
        %357 = vset.pattern.permute.xlu0 0
        %358 = vperm.xlu0 %357, %v316
        %v359 = vpop.permute.xlu0 %358
        %362 = vset.pattern.permute.xlu0 0
        %363 = vperm.xlu0 %362, %v317
        %v364 = vpop.permute.xlu0 %363
        %367 = vset.pattern.permute.xlu0 0
        %368 = vperm.xlu0 %367, %v318
        %v369 = vpop.permute.xlu0 %368
        %372 = vset.pattern.permute.xlu0 0
        %373 = vperm.xlu0 %372, %v319
        %v374 = vpop.permute.xlu0 %373
        %377 = vset.pattern.permute.xlu0 0
        %378 = vperm.xlu0 %377, %v320
        %v379 = vpop.permute.xlu0 %378
        %382 = vset.pattern.permute.xlu0 0
        %383 = vperm.xlu0 %382, %v321
        %v384 = vpop.permute.xlu0 %383
        %387 = vset.pattern.permute.xlu0 0
        %388 = vperm.xlu0 %387, %v322
        %v389 = vpop.permute.xlu0 %388
        %392 = vset.pattern.permute.xlu0 0
        %393 = vperm.xlu0 %392, %v323
        %v394 = vpop.permute.xlu0 %393
        %397 = vset.pattern.permute.xlu0 0
        %398 = vperm.xlu0 %397, %v324
        %v399 = vpop.permute.xlu0 %398
        %402 = vset.pattern.permute.xlu0 0
        %403 = vperm.xlu0 %402, %v325
        %v404 = vpop.permute.xlu0 %403
        %407 = vset.pattern.permute.xlu0 0
        %408 = vperm.xlu0 %407, %v326
        %v409 = vpop.permute.xlu0 %408
        %412 = vset.pattern.permute.xlu0 0
        %413 = vperm.xlu0 %412, %v327
        %v414 = vpop.permute.xlu0 %413
        %417 = vset.pattern.permute.xlu0 0
        %418 = vperm.xlu0 %417, %v328
        %v419 = vpop.permute.xlu0 %418
        %422 = vset.pattern.permute.xlu0 0
        %423 = vperm.xlu0 %422, %v329
        %v424 = vpop.permute.xlu0 %423
        %427 = vset.pattern.permute.xlu0 0
        %428 = vperm.xlu0 %427, %v330
        %v429 = vpop.permute.xlu0 %428
        %432 = vset.pattern.permute.xlu0 0
        %433 = vperm.xlu0 %432, %v331
        %v434 = vpop.permute.xlu0 %433
        %437 = vset.pattern.permute.xlu0 0
        %438 = vperm.xlu0 %437, %v332
        %v439 = vpop.permute.xlu0 %438
        %442 = vset.pattern.permute.xlu0 0
        %443 = vperm.xlu0 %442, %v333
        %v444 = vpop.permute.xlu0 %443
        %447 = vset.pattern.permute.xlu0 0
        %448 = vperm.xlu0 %447, %v334
        %v449 = vpop.permute.xlu0 %448
        %452 = vset.pattern.permute.xlu0 0
        %453 = vperm.xlu0 %452, %v335
        %v454 = vpop.permute.xlu0 %453
        %457 = vset.pattern.permute.xlu0 0
        %458 = vperm.xlu0 %457, %v336
        %v459 = vpop.permute.xlu0 %458
        %462 = vset.pattern.permute.xlu0 0
        %463 = vperm.xlu0 %462, %v337
        %v464 = vpop.permute.xlu0 %463
        %467 = vset.pattern.permute.xlu0 0
        %468 = vperm.xlu0 %467, %v338
        %v469 = vpop.permute.xlu0 %468
        %472 = vset.pattern.permute.xlu0 0
        %473 = vperm.xlu0 %472, %v339
        %v474 = vpop.permute.xlu0 %473
        %477 = vset.pattern.permute.xlu0 0
        %478 = vperm.xlu0 %477, %v340
        %v479 = vpop.permute.xlu0 %478
        %482 = vset.pattern.permute.xlu0 0
        %483 = vperm.xlu0 %482, %v341
        %v484 = vpop.permute.xlu0 %483
        %487 = vset.pattern.permute.xlu0 0
        %488 = vperm.xlu0 %487, %v342
        %v489 = vpop.permute.xlu0 %488
        %492 = vset.pattern.permute.xlu0 0
        %493 = vperm.xlu0 %492, %v343
        %v494 = vpop.permute.xlu0 %493
        %497 = vset.pattern.permute.xlu0 0
        %498 = vperm.xlu0 %497, %v344
        %v499 = vpop.permute.xlu0 %498
        %502 = vset.pattern.permute.xlu0 0
        %503 = vperm.xlu0 %502, %v345
        %v504 = vpop.permute.xlu0 %503
        %vm506 = vcmask 130048
        %v508 = vsel %vm506, %v280, 0
        %v511 = vsel %vm506, %v281, 0
        %v514 = vsel %vm506, %v282, 0
        %v517 = vsel %vm506, %v283, 0
        %v520 = vsel %vm506, %v284, 0
        %v523 = vsel %vm506, %v285, 0
        %v526 = vsel %vm506, %v286, 0
        %v529 = vsel %vm506, %v287, 0
        %v532 = vsel %vm506, %v288, 0
        %v535 = vsel %vm506, %v289, 0
        %v538 = vsel %vm506, %v290, 0
        %v541 = vsel %vm506, %v291, 0
        %v544 = vsel %vm506, %v292, 0
        %v547 = vsel %vm506, %v293, 0
        %v550 = vsel %vm506, %v294, 0
        %v553 = vsel %vm506, %v295, 0
        %v556 = vsel %vm506, %v296, 0
        %v559 = vsel %vm506, %v297, 0
        %v562 = vsel %vm506, %v298, 0
        %v565 = vsel %vm506, %v299, 0
        %v568 = vsel %vm506, %v300, 0
        %v571 = vsel %vm506, %v301, 0
        %v574 = vsel %vm506, %v302, 0
        %v577 = vsel %vm506, %v303, 0
        %v580 = vsel %vm506, %v304, 0
        %v583 = vsel %vm506, %v305, 0
        %v586 = vsel %vm506, %v306, 0
        %v589 = vsel %vm506, %v307, 0
        %v592 = vsel %vm506, %v308, 0
        %v595 = vsel %vm506, %v309, 0
        %v598 = vsel %vm506, %v310, 0
        %v601 = vsel %vm506, %v311, 0
        %603 = vmatprep.subr.mxu0 0.0
        %604 = vmatpush1.msra.mxu0 0.0
        %605 = vmatprep.subr.mxu0 0.0
        %606 = vmatpush1.msra.mxu0 0.0
        %607 = vmatprep.subr.mxu0 0.0
        %608 = vmatpush1.msra.mxu0 0.0
        %609 = vmatprep.subr.mxu0 0.0
        %610 = vmatpush1.msra.mxu0 0.0
        %611 = vmatprep.subr.mxu0 0.0
        %612 = vmatpush1.msra.mxu0 0.0
        %613 = vmatprep.subr.mxu0 0.0
        %614 = vmatpush1.msra.mxu0 0.0
        %615 = vmatprep.subr.mxu0 0.0
        %616 = vmatpush1.msra.mxu0 0.0
        %617 = vmatprep.subr.mxu0 0.0
        %618 = vmatpush1.msra.mxu0 0.0
        %619 = vmatprep.subr.mxu0 0.0
        %620 = vmatpush1.msra.mxu0 0.0
        %621 = vmatprep.subr.mxu0 0.0
        %622 = vmatpush1.msra.mxu0 0.0
        %623 = vmatprep.subr.mxu0 0.0
        %624 = vmatpush1.msra.mxu0 0.0
        %625 = vmatprep.subr.mxu0 0.0
        %626 = vmatpush1.msra.mxu0 0.0
        %627 = vmatprep.subr.mxu0 0.0
        %628 = vmatpush1.msra.mxu0 0.0
        %629 = vmatprep.subr.mxu0 0.0
        %630 = vmatpush1.msra.mxu0 0.0
        %631 = vmatprep.subr.mxu0 0.0
        %632 = vmatpush1.msra.mxu0 %v313
        %633 = vmatprep.subr.mxu0 0.0
        %634 = vmatpush1.msra.mxu0 %v312
        %635 = vmatprep.subr.mxu0 0.0
        %636 = vmatpush2.msra.mxu0 0.0
        %637 = vmatprep.subr.mxu0 0.0
        %638 = vmatpush2.msra.mxu0 0.0
        %639 = vmatprep.subr.mxu0 0.0
        %640 = vmatpush2.msra.mxu0 0.0
        %641 = vmatprep.subr.mxu0 0.0
        %642 = vmatpush2.msra.mxu0 0.0
        %643 = vmatprep.subr.mxu0 0.0
        %644 = vmatpush2.msra.mxu0 0.0
        %645 = vmatprep.subr.mxu0 0.0
        %646 = vmatpush2.msra.mxu0 0.0
        %647 = vmatprep.subr.mxu0 0.0
        %648 = vmatpush2.msra.mxu0 0.0
        %649 = vmatprep.subr.mxu0 0.0
        %650 = vmatpush2.msra.mxu0 0.0
        %651 = vmatprep.subr.mxu0 0.0
        %652 = vmatpush2.msra.mxu0 0.0
        %653 = vmatprep.subr.mxu0 0.0
        %654 = vmatpush2.msra.mxu0 0.0
        %655 = vmatprep.subr.mxu0 0.0
        %656 = vmatpush2.msra.mxu0 0.0
        %657 = vmatprep.subr.mxu0 0.0
        %658 = vmatpush2.msra.mxu0 0.0
        %659 = vmatprep.subr.mxu0 0.0
        %660 = vmatpush2.msra.mxu0 0.0
        %661 = vmatprep.subr.mxu0 0.0
        %662 = vmatpush2.msra.mxu0 0.0
        %663 = vmatprep.subr.mxu0 0.0
        %664 = vmatpush2.msra.mxu0 0.0
        %665 = vmatprep.subr.mxu0 0.0
        %666 = vmatpush2.msra.mxu0 0.0
        %667 = vmatprep.mubr.f32.mxu0 0.0
        %668 = vmatmul.mubr.f32.gmra.mxu0 %v508
        %v669 = vpop.f32.mrf.mxu0
        %v670 = vadd.f32 %v349, %v669
        %v671 = vpop.f32.mrf.mxu0
        %672 = vmatprep.mubr.f32.mxu0 0.0
        %673 = vmatmul.mubr.f32.gmra.mxu0 %v511
        %v674 = vpop.f32.mrf.mxu0
        %v675 = vadd.f32 %v354, %v674
        %v676 = vpop.f32.mrf.mxu0
        %677 = vmatprep.mubr.f32.mxu0 0.0
        %678 = vmatmul.mubr.f32.gmra.mxu0 %v514
        %v679 = vpop.f32.mrf.mxu0
        %v680 = vadd.f32 %v359, %v679
        %v681 = vpop.f32.mrf.mxu0
        %682 = vmatprep.mubr.f32.mxu0 0.0
        %683 = vmatmul.mubr.f32.gmra.mxu0 %v517
        %v684 = vpop.f32.mrf.mxu0
        %v685 = vadd.f32 %v364, %v684
        %v686 = vpop.f32.mrf.mxu0
        %687 = vmatprep.mubr.f32.mxu0 0.0
        %688 = vmatmul.mubr.f32.gmra.mxu0 %v520
        %v689 = vpop.f32.mrf.mxu0
        %v690 = vadd.f32 %v369, %v689
        %v691 = vpop.f32.mrf.mxu0
        %692 = vmatprep.mubr.f32.mxu0 0.0
        %693 = vmatmul.mubr.f32.gmra.mxu0 %v523
        %v694 = vpop.f32.mrf.mxu0
        %v695 = vadd.f32 %v374, %v694
        %v696 = vpop.f32.mrf.mxu0
        %697 = vmatprep.mubr.f32.mxu0 0.0
        %698 = vmatmul.mubr.f32.gmra.mxu0 %v526
        %v699 = vpop.f32.mrf.mxu0
        %v700 = vadd.f32 %v379, %v699
        %v701 = vpop.f32.mrf.mxu0
        %702 = vmatprep.mubr.f32.mxu0 0.0
        %703 = vmatmul.mubr.f32.gmra.mxu0 %v529
        %v704 = vpop.f32.mrf.mxu0
        %v705 = vadd.f32 %v384, %v704
        %v706 = vpop.f32.mrf.mxu0
        %707 = vmatprep.mubr.f32.mxu0 0.0
        %708 = vmatmul.mubr.f32.gmra.mxu0 %v532
        %v709 = vpop.f32.mrf.mxu0
        %v710 = vadd.f32 %v389, %v709
        %v711 = vpop.f32.mrf.mxu0
        %712 = vmatprep.mubr.f32.mxu0 0.0
        %713 = vmatmul.mubr.f32.gmra.mxu0 %v535
        %v714 = vpop.f32.mrf.mxu0
        %v715 = vadd.f32 %v394, %v714
        %v716 = vpop.f32.mrf.mxu0
        %717 = vmatprep.mubr.f32.mxu0 0.0
        %718 = vmatmul.mubr.f32.gmra.mxu0 %v538
        %v719 = vpop.f32.mrf.mxu0
        %v720 = vadd.f32 %v399, %v719
        %v721 = vpop.f32.mrf.mxu0
        %722 = vmatprep.mubr.f32.mxu0 0.0
        %723 = vmatmul.mubr.f32.gmra.mxu0 %v541
        %v724 = vpop.f32.mrf.mxu0
        %v725 = vadd.f32 %v404, %v724
        %v726 = vpop.f32.mrf.mxu0
        %727 = vmatprep.mubr.f32.mxu0 0.0
        %728 = vmatmul.mubr.f32.gmra.mxu0 %v544
        %v729 = vpop.f32.mrf.mxu0
        %v730 = vadd.f32 %v409, %v729
        %v731 = vpop.f32.mrf.mxu0
        %732 = vmatprep.mubr.f32.mxu0 0.0
        %733 = vmatmul.mubr.f32.gmra.mxu0 %v547
        %v734 = vpop.f32.mrf.mxu0
        %v735 = vadd.f32 %v414, %v734
        %v736 = vpop.f32.mrf.mxu0
        %737 = vmatprep.mubr.f32.mxu0 0.0
        %738 = vmatmul.mubr.f32.gmra.mxu0 %v550
        %v739 = vpop.f32.mrf.mxu0
        %v740 = vadd.f32 %v419, %v739
        %v741 = vpop.f32.mrf.mxu0
        %742 = vmatprep.mubr.f32.mxu0 0.0
        %743 = vmatmul.mubr.f32.gmra.mxu0 %v553
        %v744 = vpop.f32.mrf.mxu0
        %v745 = vadd.f32 %v424, %v744
        %v746 = vpop.f32.mrf.mxu0
        %747 = vmatprep.mubr.f32.mxu0 0.0
        %748 = vmatmul.mubr.f32.gmra.mxu0 %v556
        %v749 = vpop.f32.mrf.mxu0
        %v750 = vadd.f32 %v429, %v749
        %v751 = vpop.f32.mrf.mxu0
        %752 = vmatprep.mubr.f32.mxu0 0.0
        %753 = vmatmul.mubr.f32.gmra.mxu0 %v559
        %v754 = vpop.f32.mrf.mxu0
        %v755 = vadd.f32 %v434, %v754
        %v756 = vpop.f32.mrf.mxu0
        %757 = vmatprep.mubr.f32.mxu0 0.0
        %758 = vmatmul.mubr.f32.gmra.mxu0 %v562
        %v759 = vpop.f32.mrf.mxu0
        %v760 = vadd.f32 %v439, %v759
        %v761 = vpop.f32.mrf.mxu0
        %762 = vmatprep.mubr.f32.mxu0 0.0
        %763 = vmatmul.mubr.f32.gmra.mxu0 %v565
        %v764 = vpop.f32.mrf.mxu0
        %v765 = vadd.f32 %v444, %v764
        %v766 = vpop.f32.mrf.mxu0
        %767 = vmatprep.mubr.f32.mxu0 0.0
        %768 = vmatmul.mubr.f32.gmra.mxu0 %v568
        %v769 = vpop.f32.mrf.mxu0
        %v770 = vadd.f32 %v449, %v769
        %v771 = vpop.f32.mrf.mxu0
        %772 = vmatprep.mubr.f32.mxu0 0.0
        %773 = vmatmul.mubr.f32.gmra.mxu0 %v571
        %v774 = vpop.f32.mrf.mxu0
        %v775 = vadd.f32 %v454, %v774
        %v776 = vpop.f32.mrf.mxu0
        %777 = vmatprep.mubr.f32.mxu0 0.0
        %778 = vmatmul.mubr.f32.gmra.mxu0 %v574
        %v779 = vpop.f32.mrf.mxu0
        %v780 = vadd.f32 %v459, %v779
        %v781 = vpop.f32.mrf.mxu0
        %782 = vmatprep.mubr.f32.mxu0 0.0
        %783 = vmatmul.mubr.f32.gmra.mxu0 %v577
        %v784 = vpop.f32.mrf.mxu0
        %v785 = vadd.f32 %v464, %v784
        %v786 = vpop.f32.mrf.mxu0
        %787 = vmatprep.mubr.f32.mxu0 0.0
        %788 = vmatmul.mubr.f32.gmra.mxu0 %v580
        %v789 = vpop.f32.mrf.mxu0
        %v790 = vadd.f32 %v469, %v789
        %v791 = vpop.f32.mrf.mxu0
        %792 = vmatprep.mubr.f32.mxu0 0.0
        %793 = vmatmul.mubr.f32.gmra.mxu0 %v583
        %v794 = vpop.f32.mrf.mxu0
        %v795 = vadd.f32 %v474, %v794
        %v796 = vpop.f32.mrf.mxu0
        %797 = vmatprep.mubr.f32.mxu0 0.0
        %798 = vmatmul.mubr.f32.gmra.mxu0 %v586
        %v799 = vpop.f32.mrf.mxu0
        %v800 = vadd.f32 %v479, %v799
        %v801 = vpop.f32.mrf.mxu0
        %802 = vmatprep.mubr.f32.mxu0 0.0
        %803 = vmatmul.mubr.f32.gmra.mxu0 %v589
        %v804 = vpop.f32.mrf.mxu0
        %v805 = vadd.f32 %v484, %v804
        %v806 = vpop.f32.mrf.mxu0
        %807 = vmatprep.mubr.f32.mxu0 0.0
        %808 = vmatmul.mubr.f32.gmra.mxu0 %v592
        %v809 = vpop.f32.mrf.mxu0
        %v810 = vadd.f32 %v489, %v809
        %v811 = vpop.f32.mrf.mxu0
        %812 = vmatprep.mubr.f32.mxu0 0.0
        %813 = vmatmul.mubr.f32.gmra.mxu0 %v595
        %v814 = vpop.f32.mrf.mxu0
        %v815 = vadd.f32 %v494, %v814
        %v816 = vpop.f32.mrf.mxu0
        %817 = vmatprep.mubr.f32.mxu0 0.0
        %818 = vmatmul.mubr.f32.gmra.mxu0 %v598
        %v819 = vpop.f32.mrf.mxu0
        %v820 = vadd.f32 %v499, %v819
        %v821 = vpop.f32.mrf.mxu0
        %822 = vmatprep.mubr.f32.mxu0 0.0
        %823 = vmatmul.mubr.f32.gmra.mxu0 %v601
        %v824 = vpop.f32.mrf.mxu0
        %v825 = vadd.f32 %v504, %v824
        %v826 = vpop.f32.mrf.mxu0
        %827 = vdwg.mxu0
        %v828 = vmul.f32 %v670, 0.5
        %v829 = vmul.f32 %v675, 0.5
        %v830 = vmul.f32 %v680, 0.5
        %v831 = vmul.f32 %v685, 0.5
        %v832 = vmul.f32 %v690, 0.5
        %v833 = vmul.f32 %v695, 0.5
        %v834 = vmul.f32 %v700, 0.5
        %v835 = vmul.f32 %v705, 0.5
        %v836 = vmul.f32 %v710, 0.5
        %v837 = vmul.f32 %v715, 0.5
        %v838 = vmul.f32 %v720, 0.5
        %v839 = vmul.f32 %v725, 0.5
        %v840 = vmul.f32 %v730, 0.5
        %v841 = vmul.f32 %v735, 0.5
        %v842 = vmul.f32 %v740, 0.5
        %v843 = vmul.f32 %v745, 0.5
        %v844 = vmul.f32 %v750, 0.5
        %v845 = vmul.f32 %v755, 0.5
        %v846 = vmul.f32 %v760, 0.5
        %v847 = vmul.f32 %v765, 0.5
        %v848 = vmul.f32 %v770, 0.5
        %v849 = vmul.f32 %v775, 0.5
        %v850 = vmul.f32 %v780, 0.5
        %v851 = vmul.f32 %v785, 0.5
        %v852 = vmul.f32 %v790, 0.5
        %v853 = vmul.f32 %v795, 0.5
        %v854 = vmul.f32 %v800, 0.5
        %v855 = vmul.f32 %v805, 0.5
        %v856 = vmul.f32 %v810, 0.5
        %v857 = vmul.f32 %v815, 0.5
        %v858 = vmul.f32 %v820, 0.5
        %v859 = vmul.f32 %v825, 0.5
        %v860 = vmul.f32 %v670, 0.70710677
        %v861 = vmul.f32 %v675, 0.70710677
        %v862 = vmul.f32 %v680, 0.70710677
        %v863 = vmul.f32 %v685, 0.70710677
        %v864 = vmul.f32 %v690, 0.70710677
        %v865 = vmul.f32 %v695, 0.70710677
        %v866 = vmul.f32 %v700, 0.70710677
        %v867 = vmul.f32 %v705, 0.70710677
        %v868 = vmul.f32 %v710, 0.70710677
        %v869 = vmul.f32 %v715, 0.70710677
        %v870 = vmul.f32 %v720, 0.70710677
        %v871 = vmul.f32 %v725, 0.70710677
        %v872 = vmul.f32 %v730, 0.70710677
        %v873 = vmul.f32 %v735, 0.70710677
        %v874 = vmul.f32 %v740, 0.70710677
        %v875 = vmul.f32 %v745, 0.70710677
        %v876 = vmul.f32 %v750, 0.70710677
        %v877 = vmul.f32 %v755, 0.70710677
        %v878 = vmul.f32 %v760, 0.70710677
        %v879 = vmul.f32 %v765, 0.70710677
        %v880 = vmul.f32 %v770, 0.70710677
        %v881 = vmul.f32 %v775, 0.70710677
        %v882 = vmul.f32 %v780, 0.70710677
        %v883 = vmul.f32 %v785, 0.70710677
        %v884 = vmul.f32 %v790, 0.70710677
        %v885 = vmul.f32 %v795, 0.70710677
        %v886 = vmul.f32 %v800, 0.70710677
        %v887 = vmul.f32 %v805, 0.70710677
        %v888 = vmul.f32 %v810, 0.70710677
        %v889 = vmul.f32 %v815, 0.70710677
        %v890 = vmul.f32 %v820, 0.70710677
        %v891 = vmul.f32 %v825, 0.70710677
        %v892 = verf.f32.pop %v860
        %v893 = verf.f32.pop %v861
        %v894 = verf.f32.pop %v862
        %v895 = verf.f32.pop %v863
        %v896 = verf.f32.pop %v864
        %v897 = verf.f32.pop %v865
        %v898 = verf.f32.pop %v866
        %v899 = verf.f32.pop %v867
        %v900 = verf.f32.pop %v868
        %v901 = verf.f32.pop %v869
        %v902 = verf.f32.pop %v870
        %v903 = verf.f32.pop %v871
        %v904 = verf.f32.pop %v872
        %v905 = verf.f32.pop %v873
        %v906 = verf.f32.pop %v874
        %v907 = verf.f32.pop %v875
        %v908 = verf.f32.pop %v876
        %v909 = verf.f32.pop %v877
        %v910 = verf.f32.pop %v878
        %v911 = verf.f32.pop %v879
        %v912 = verf.f32.pop %v880
        %v913 = verf.f32.pop %v881
        %v914 = verf.f32.pop %v882
        %v915 = verf.f32.pop %v883
        %v916 = verf.f32.pop %v884
        %v917 = verf.f32.pop %v885
        %v918 = verf.f32.pop %v886
        %v919 = verf.f32.pop %v887
        %v920 = verf.f32.pop %v888
        %v921 = verf.f32.pop %v889
        %v922 = verf.f32.pop %v890
        %v923 = verf.f32.pop %v891
        %v924 = vadd.f32 %v892, 1.0
        %v925 = vadd.f32 %v893, 1.0
        %v926 = vadd.f32 %v894, 1.0
        %v927 = vadd.f32 %v895, 1.0
        %v928 = vadd.f32 %v896, 1.0
        %v929 = vadd.f32 %v897, 1.0
        %v930 = vadd.f32 %v898, 1.0
        %v931 = vadd.f32 %v899, 1.0
        %v932 = vadd.f32 %v900, 1.0
        %v933 = vadd.f32 %v901, 1.0
        %v934 = vadd.f32 %v902, 1.0
        %v935 = vadd.f32 %v903, 1.0
        %v936 = vadd.f32 %v904, 1.0
        %v937 = vadd.f32 %v905, 1.0
        %v938 = vadd.f32 %v906, 1.0
        %v939 = vadd.f32 %v907, 1.0
        %v940 = vadd.f32 %v908, 1.0
        %v941 = vadd.f32 %v909, 1.0
        %v942 = vadd.f32 %v910, 1.0
        %v943 = vadd.f32 %v911, 1.0
        %v944 = vadd.f32 %v912, 1.0
        %v945 = vadd.f32 %v913, 1.0
        %v946 = vadd.f32 %v914, 1.0
        %v947 = vadd.f32 %v915, 1.0
        %v948 = vadd.f32 %v916, 1.0
        %v949 = vadd.f32 %v917, 1.0
        %v950 = vadd.f32 %v918, 1.0
        %v951 = vadd.f32 %v919, 1.0
        %v952 = vadd.f32 %v920, 1.0
        %v953 = vadd.f32 %v921, 1.0
        %v954 = vadd.f32 %v922, 1.0
        %v955 = vadd.f32 %v923, 1.0
        %v956 = vmul.f32 %v828, %v924
        %v957 = vmul.f32 %v829, %v925
        %v958 = vmul.f32 %v830, %v926
        %v959 = vmul.f32 %v831, %v927
        %v960 = vmul.f32 %v832, %v928
        %v961 = vmul.f32 %v833, %v929
        %v962 = vmul.f32 %v834, %v930
        %v963 = vmul.f32 %v835, %v931
        %v964 = vmul.f32 %v836, %v932
        %v965 = vmul.f32 %v837, %v933
        %v966 = vmul.f32 %v838, %v934
        %v967 = vmul.f32 %v839, %v935
        %v968 = vmul.f32 %v840, %v936
        %v969 = vmul.f32 %v841, %v937
        %v970 = vmul.f32 %v842, %v938
        %v971 = vmul.f32 %v843, %v939
        %v972 = vmul.f32 %v844, %v940
        %v973 = vmul.f32 %v845, %v941
        %v974 = vmul.f32 %v846, %v942
        %v975 = vmul.f32 %v847, %v943
        %v976 = vmul.f32 %v848, %v944
        %v977 = vmul.f32 %v849, %v945
        %v978 = vmul.f32 %v850, %v946
        %v979 = vmul.f32 %v851, %v947
        %v980 = vmul.f32 %v852, %v948
        %v981 = vmul.f32 %v853, %v949
        %v982 = vmul.f32 %v854, %v950
        %v983 = vmul.f32 %v855, %v951
        %v984 = vmul.f32 %v856, %v952
        %v985 = vmul.f32 %v857, %v953
        %v986 = vmul.f32 %v858, %v954
        %v987 = vmul.f32 %v859, %v955
        %v988 = vld [vmem:[%s3] sm:$0xff]
        %v989 = vld [vmem:[%s3 + $0x8] sm:$0xff]
        %v990 = vld [vmem:[%s3 + $0x10] sm:$0xff]
        %v991 = vld [vmem:[%s3 + $0x18] sm:$0xff]
        %v992 = vld [vmem:[%s4] sm:$0xff]
        %v993 = vld [vmem:[%s4 + $0x8] sm:$0xff]
        %995 = vset.pattern.permute.xlu0 0
        %996 = vperm.xlu0 %995, %v992
        %v997 = vpop.permute.xlu0 %996
        %1000 = vset.pattern.permute.xlu0 0
        %1001 = vperm.xlu0 %1000, %v993
        %v1002 = vpop.permute.xlu0 %1001
        %1004 = vmatprep.subr.mxu0 0.0
        %1005 = vmatpush1.msra.mxu0 %v971
        %1006 = vmatprep.subr.mxu0 0.0
        %1007 = vmatpush1.msra.mxu0 %v970
        %1008 = vmatprep.subr.mxu0 0.0
        %1009 = vmatpush1.msra.mxu0 %v969
        %1010 = vmatprep.subr.mxu0 0.0
        %1011 = vmatpush1.msra.mxu0 %v968
        %1012 = vmatprep.subr.mxu0 0.0
        %1013 = vmatpush1.msra.mxu0 %v967
        %1014 = vmatprep.subr.mxu0 0.0
        %1015 = vmatpush1.msra.mxu0 %v966
        %1016 = vmatprep.subr.mxu0 0.0
        %1017 = vmatpush1.msra.mxu0 %v965
        %1018 = vmatprep.subr.mxu0 0.0
        %1019 = vmatpush1.msra.mxu0 %v964
        %1020 = vmatprep.subr.mxu0 0.0
        %1021 = vmatpush1.msra.mxu0 %v963
        %1022 = vmatprep.subr.mxu0 0.0
        %1023 = vmatpush1.msra.mxu0 %v962
        %1024 = vmatprep.subr.mxu0 0.0
        %1025 = vmatpush1.msra.mxu0 %v961
        %1026 = vmatprep.subr.mxu0 0.0
        %1027 = vmatpush1.msra.mxu0 %v960
        %1028 = vmatprep.subr.mxu0 0.0
        %1029 = vmatpush1.msra.mxu0 %v959
        %1030 = vmatprep.subr.mxu0 0.0
        %1031 = vmatpush1.msra.mxu0 %v958
        %1032 = vmatprep.subr.mxu0 0.0
        %1033 = vmatpush1.msra.mxu0 %v957
        %1034 = vmatprep.subr.mxu0 0.0
        %1035 = vmatpush1.msra.mxu0 %v956
        %1036 = vmatprep.subr.mxu0 0.0
        %1037 = vmatpush2.msra.mxu0 %v987
        %1038 = vmatprep.subr.mxu0 0.0
        %1039 = vmatpush2.msra.mxu0 %v986
        %1040 = vmatprep.subr.mxu0 0.0
        %1041 = vmatpush2.msra.mxu0 %v985
        %1042 = vmatprep.subr.mxu0 0.0
        %1043 = vmatpush2.msra.mxu0 %v984
        %1044 = vmatprep.subr.mxu0 0.0
        %1045 = vmatpush2.msra.mxu0 %v983
        %1046 = vmatprep.subr.mxu0 0.0
        %1047 = vmatpush2.msra.mxu0 %v982
        %1048 = vmatprep.subr.mxu0 0.0
        %1049 = vmatpush2.msra.mxu0 %v981
        %1050 = vmatprep.subr.mxu0 0.0
        %1051 = vmatpush2.msra.mxu0 %v980
        %1052 = vmatprep.subr.mxu0 0.0
        %1053 = vmatpush2.msra.mxu0 %v979
        %1054 = vmatprep.subr.mxu0 0.0
        %1055 = vmatpush2.msra.mxu0 %v978
        %1056 = vmatprep.subr.mxu0 0.0
        %1057 = vmatpush2.msra.mxu0 %v977
        %1058 = vmatprep.subr.mxu0 0.0
        %1059 = vmatpush2.msra.mxu0 %v976
        %1060 = vmatprep.subr.mxu0 0.0
        %1061 = vmatpush2.msra.mxu0 %v975
        %1062 = vmatprep.subr.mxu0 0.0
        %1063 = vmatpush2.msra.mxu0 %v974
        %1064 = vmatprep.subr.mxu0 0.0
        %1065 = vmatpush2.msra.mxu0 %v973
        %1066 = vmatprep.subr.mxu0 0.0
        %1067 = vmatpush2.msra.mxu0 %v972
        %1068 = vmatprep.mubr.f32.mxu0 %v989
        %1069 = vmatmul.mubr.f32.gmra.mxu0 %v988
        %v1070 = vpop.f32.mrf.mxu0
        %v1071 = vadd.f32 %v997, %v1070
        %v1072 = vpop.f32.mrf.mxu0
        %1073 = vmatprep.mubr.f32.mxu0 %v991
        %1074 = vmatmul.mubr.f32.gmra.mxu0 %v990
        %v1075 = vpop.f32.mrf.mxu0
        %v1076 = vadd.f32 %v1002, %v1075
        %v1077 = vpop.f32.mrf.mxu0
        %1078 = vdwg.mxu0
        %1079 = vst [vmem:[%s279] sm:$0xff] %v1071
        %1080 = vst [vmem:[%s279 + $0x8] sm:$0xff] %v1076
        %s1081 = sand.u32 %s153, 1
        %s1082 = scalar_lea.sflag [#allocation4], %s1081
        %s1083 = sand.u32 %s153, 1
        %s1084 = smul.addr %s1083, 16
        %s1085 = scalar_lea.vmem [#allocation3], %s1084
        // Predicated region
        $region79: #{tpu_custom_call.1} parent=73 // pred_check
          %p1086 = pneg %p163
        $region80: #{tpu_custom_call.1} parent=73 // pred_check_branch
          %1088 = sbr.rel (%p1086) target = $region82
        $region81: #{tpu_custom_call.1} parent=73 // pred_region
          %s1090 = ssub.s32 256, 256
          %1091 = vsyncadd %s1082, %s1090
          %s1092 = smul.addr %s23, 4
          %s1093 = sadd.s32 %s24, %s1092
          %s1094 = smul.addr %s1093, 128
          %s1095 = scalar_lea.hbm %s5, %s1094
          %s1096 = sshll.u32 %s1085, 4
          %s1097 = int_to_ptr.vmem [resolvable:$true] %s1096
          %1102 = dma.vmem_to_hbm [thread:$0]  %s1097, 256, %s1095, %s1082, 128, 256, 8
        $region82: #{tpu_custom_call.1} parent=73 // pred_fallthru
          _
      $region74: #{tpu_custom_call.1} parent=5 // pred_fallthru
        _
      %p1103 = scmp.le.s32.totalorder 2, %s14
      // Predicated region
      $region83: #{tpu_custom_call.1} parent=5 // pred_check
        %p1104 = pneg %p1103
      $region84: #{tpu_custom_call.1} parent=5 // pred_check_branch
        %1106 = sbr.rel (%p1104) target = $region86
      $region85: #{tpu_custom_call.1} parent=5 // pred_region
        %s1107 = ssub.s32 %s14, 2
        // Predicated region
        $region87: #{tpu_custom_call.1} parent=85 // pred_check
          %p1108 = pneg %p169
        $region88: #{tpu_custom_call.1} parent=85 // pred_check_branch
          %1110 = sbr.rel (%p1108) target = $region90
        $region89: #{tpu_custom_call.1} parent=85 // pred_region
          %s1111 = sand.u32 %s154, 1
          %s1112 = scalar_lea.sflag [#allocation4], %s1111
          %s1113 = sand.u32 %s154, 1
          %s1114 = smul.addr %s1113, 16
          %s1115 = scalar_lea.vmem [#allocation3], %s1114
          %1116 = dma.done %s1112, 256
        $region90: #{tpu_custom_call.1} parent=85 // pred_fallthru
          _
      $region86: #{tpu_custom_call.1} parent=5 // pred_fallthru
        _
    $region6: #{tpu_custom_call.1} parent=1 // loop_footer
      %s18 = sadd.s32 1, %s14
    $region7: #{tpu_custom_call.1} parent=1 // loop_footer_branch
      %13 = sbr.rel target = $region3
    $region8: #{tpu_custom_call.1} parent=1 // loop_exit
      _
    %1117 = vsyncpa [#allocation4], 1
    %s1118 = scalar_lea.sflag [#allocation4], 1
    %1119 = vsyncpa %s1118, 1

// kernel: tpu_custom_call.1
$region0: #{tpu_custom_call.1}
  #allocation0 [shape = 'u32[]', space=smem, size = 0x4, offset = 0x4, fixed_abs, tag = 'smem constant byte address 0x4 - core index']
  #allocation1 [shape = 'u32[144,128]{1,0:T(1,128)}', space=vmem, size = 0x12000, scoped, tag = 'internal scratch']
  %s0 = inlined_call_operand.vmem [shape: f32[2,16,256], index: 0, kind: input, shape index: {}]
  %s1 = inlined_call_operand.vmem [shape: f32[256,16], index: 1, kind: input, shape index: {}]
  %s2 = inlined_call_operand.vmem [shape: f32[256,1], index: 2, kind: input, shape index: {}]
  %s3 = inlined_call_operand.vmem [shape: f32[16,256], index: 3, kind: input, shape index: {}]
  %s4 = inlined_call_operand.vmem [shape: f32[16,1], index: 4, kind: input, shape index: {}]
  %s5 = inlined_call_operand.hbm [shape: f32[2,16,256], index: 5, kind: output, shape index: {}]
  %s6 = sld [smem:[#allocation0]]
  $region91: #{tpu_custom_call.1} parent=0
    _
  %s8 = ssub.s32 1, %s6
  %s9 = scalar_select 0, %s8, %s6
  $region1: #{tpu_custom_call.1} parent=0
    #allocation2 [shape = 'u8[16384]{0}', space=vmem, size = 0x4000, scoped, tag = 'input window, operand 0']
    #allocation3 [shape = 'u8[16384]{0}', space=vmem, size = 0x4000, scoped, tag = 'output window, operand 0']
    #allocation4 [shape = 's32[2]{0}', space=sflag, size = 0x8, scoped, tag = 'scoped memory for tpu_custom_call.1']
    %10 = vsyncpa [#allocation4], 0
    %s11 = scalar_lea.sflag [#allocation4], 1
    %12 = vsyncpa %s11, 0
    loop: start=0, step=1, limit=6
    $region2: #{tpu_custom_call.1} parent=1 // loop_pre_header
      _
    $region3: #{tpu_custom_call.1} parent=1 // loop_header
      %s14 = sphi 0, %s18
      %p15 = scmp.ge.s32.totalorder %s14, 6
      %s21 = sphi 0, %s33
      %s22 = sphi 0, %s29
      %s23 = sphi 0, %s21
      %s24 = sphi 0, %s22
      %s25 = sphi 0, %s23
      %s26 = sphi 0, %s24
      %s38 = sphi 0, %s40
      %s41 = sphi 0, %s38
      %s42 = sphi 0, %s41
      %s58 = sphi 0, %s42
      %s62 = sphi 0, %s62
      %s64 = sphi 0, %s62
      %s65 = sphi 0, %s64
      %s79 = sphi 0, %s65
      %s83 = sphi 0, %s83
      %s85 = sphi 0, %s83
      %s86 = sphi 0, %s85
      %s100 = sphi 0, %s86
      %s104 = sphi 0, %s104
      %s106 = sphi 0, %s104
      %s107 = sphi 0, %s106
      %s121 = sphi 0, %s107
      %s125 = sphi 0, %s125
      %s127 = sphi 0, %s125
      %s128 = sphi 0, %s127
      %s142 = sphi 0, %s128
      %s150 = sphi 0, %s152
      %s153 = sphi 0, %s150
      %s154 = sphi 0, %s153
      %s170 = sphi 0, %s154
    $region4: #{tpu_custom_call.1} parent=1 // loop_header_branch
      %17 = sbr.rel (%p15) target = $region8
    $region5: #{tpu_custom_call.1} parent=1 // loop_body
      %s19 = ssub.s32 %s14, 1
      %s20 = ssub.s32 %s14, 2
      %s27 = sadd.s32 1, %s22
      %p28 = scmp.ge.s32.totalorder %s27, 2
      %s29 = scalar_select %p28, 0, %s27
      %s30 = sadd.s32 1, %s21
      %s31 = scalar_select %p28, %s30, %s21
      %p32 = scmp.ge.s32.totalorder %s31, 2
      %s33 = scalar_select %p32, 0, %s31
      %s34 = ssub.s32 %s21, %s33
      %s35 = ssub.s32 %s22, %s29
      %s36 = sor.u32 %s34, %s35
      %p37 = scmp.eq.s32.totalorder %s36, 0
      %s39 = sadd.s32 %s38, 1
      %s40 = scalar_select %p37, %s38, %s39
      %p43 = pneg %p37
      %p44 = scmp.eq.s32.totalorder %s14, 3
      %p45 = por %p43, %p44
      %p46 = scmp.ne.s32.totalorder %s38, %s41
      %p47 = scmp.eq.s32.totalorder %s14, 0
      %p48 = por %p46, %p47
      %p49 = scmp.ne.s32.totalorder %s38, %s41
      %p50 = scmp.eq.s32.totalorder %s19, 3
      %p51 = por %p49, %p50
      %p52 = scmp.ne.s32.totalorder %s41, %s42
      %p53 = scmp.eq.s32.totalorder %s19, 0
      %p54 = por %p52, %p53
      %p55 = scmp.ne.s32.totalorder %s41, %s42
      %p56 = scmp.eq.s32.totalorder %s20, 3
      %p57 = por %p55, %p56
      %p59 = scmp.ne.s32.totalorder %s42, %s58
      %p60 = scmp.eq.s32.totalorder %s20, 0
      %p61 = por %p59, %p60
      %s63 = sadd.s32 %s62, 1
      %p66 = scmp.eq.s32.totalorder %s14, 3
      %p67 = scmp.ne.s32.totalorder %s62, %s64
      %p68 = scmp.eq.s32.totalorder %s14, 0
      %p69 = por %p67, %p68
      %p70 = scmp.ne.s32.totalorder %s62, %s64
      %p71 = scmp.eq.s32.totalorder %s19, 3
      %p72 = por %p70, %p71
      %p73 = scmp.ne.s32.totalorder %s64, %s65
      %p74 = scmp.eq.s32.totalorder %s19, 0
      %p75 = por %p73, %p74
      %p76 = scmp.ne.s32.totalorder %s64, %s65
      %p77 = scmp.eq.s32.totalorder %s20, 3
      %p78 = por %p76, %p77
      %p80 = scmp.ne.s32.totalorder %s65, %s79
      %p81 = scmp.eq.s32.totalorder %s20, 0
      %p82 = por %p80, %p81
      %s84 = sadd.s32 %s83, 1
      %p87 = scmp.eq.s32.totalorder %s14, 3
      %p88 = scmp.ne.s32.totalorder %s83, %s85
      %p89 = scmp.eq.s32.totalorder %s14, 0
      %p90 = por %p88, %p89
      %p91 = scmp.ne.s32.totalorder %s83, %s85
      %p92 = scmp.eq.s32.totalorder %s19, 3
      %p93 = por %p91, %p92
      %p94 = scmp.ne.s32.totalorder %s85, %s86
      %p95 = scmp.eq.s32.totalorder %s19, 0
      %p96 = por %p94, %p95
      %p97 = scmp.ne.s32.totalorder %s85, %s86
      %p98 = scmp.eq.s32.totalorder %s20, 3
      %p99 = por %p97, %p98
      %p101 = scmp.ne.s32.totalorder %s86, %s100
      %p102 = scmp.eq.s32.totalorder %s20, 0
      %p103 = por %p101, %p102
      %s105 = sadd.s32 %s104, 1
      %p108 = scmp.eq.s32.totalorder %s14, 3
      %p109 = scmp.ne.s32.totalorder %s104, %s106
      %p110 = scmp.eq.s32.totalorder %s14, 0
      %p111 = por %p109, %p110
      %p112 = scmp.ne.s32.totalorder %s104, %s106
      %p113 = scmp.eq.s32.totalorder %s19, 3
      %p114 = por %p112, %p113
      %p115 = scmp.ne.s32.totalorder %s106, %s107
      %p116 = scmp.eq.s32.totalorder %s19, 0
      %p117 = por %p115, %p116
      %p118 = scmp.ne.s32.totalorder %s106, %s107
      %p119 = scmp.eq.s32.totalorder %s20, 3
      %p120 = por %p118, %p119
      %p122 = scmp.ne.s32.totalorder %s107, %s121
      %p123 = scmp.eq.s32.totalorder %s20, 0
      %p124 = por %p122, %p123
      %s126 = sadd.s32 %s125, 1
      %p129 = scmp.eq.s32.totalorder %s14, 3
      %p130 = scmp.ne.s32.totalorder %s125, %s127
      %p131 = scmp.eq.s32.totalorder %s14, 0
      %p132 = por %p130, %p131
      %p133 = scmp.ne.s32.totalorder %s125, %s127
      %p134 = scmp.eq.s32.totalorder %s19, 3
      %p135 = por %p133, %p134
      %p136 = scmp.ne.s32.totalorder %s127, %s128
      %p137 = scmp.eq.s32.totalorder %s19, 0
      %p138 = por %p136, %p137
      %p139 = scmp.ne.s32.totalorder %s127, %s128
      %p140 = scmp.eq.s32.totalorder %s20, 3
      %p141 = por %p139, %p140
      %p143 = scmp.ne.s32.totalorder %s128, %s142
      %p144 = scmp.eq.s32.totalorder %s20, 0
      %p145 = por %p143, %p144
      %s146 = ssub.s32 %s21, %s33
      %s147 = ssub.s32 %s22, %s29
      %s148 = sor.u32 %s146, %s147
      %p149 = scmp.eq.s32.totalorder %s148, 0
      %s151 = sadd.s32 %s150, 1
      %s152 = scalar_select %p149, %s150, %s151
      %p155 = pneg %p149
      %p156 = scmp.eq.s32.totalorder %s14, 3
      %p157 = por %p155, %p156
      %p158 = scmp.ne.s32.totalorder %s150, %s153
      %p159 = scmp.eq.s32.totalorder %s14, 0
      %p160 = por %p158, %p159
      %p161 = scmp.ne.s32.totalorder %s150, %s153
      %p162 = scmp.eq.s32.totalorder %s19, 3
      %p163 = por %p161, %p162
      %p164 = scmp.ne.s32.totalorder %s153, %s154
      %p165 = scmp.eq.s32.totalorder %s19, 0
      %p166 = por %p164, %p165
      %p167 = scmp.ne.s32.totalorder %s153, %s154
      %p168 = scmp.eq.s32.totalorder %s20, 3
      %p169 = por %p167, %p168
      %p171 = scmp.ne.s32.totalorder %s154, %s170
      %p172 = scmp.eq.s32.totalorder %s20, 0
      %p173 = por %p171, %p172
      %p174 = scmp.le.s32.totalorder 1, %s14
      %p175 = scmp.lt.s32.totalorder %s14, 5
      %p176 = pnand %p174, %p175
      %p177 = pneg %p176
      // Predicated region
      $region9: #{tpu_custom_call.1} parent=5 // pred_check
        _
      $region10: #{tpu_custom_call.1} parent=5 // pred_check_branch
        %179 = sbr.rel (%p176) target = $region12
      $region11: #{tpu_custom_call.1} parent=5 // pred_region
        %s180 = ssub.s32 %s14, 1
        // Predicated region
        $region13: #{tpu_custom_call.1} parent=11 // pred_check
          %p181 = pneg %p75
        $region14: #{tpu_custom_call.1} parent=11 // pred_check_branch
          %183 = sbr.rel (%p181) target = $region16
        $region15: #{tpu_custom_call.1} parent=11 // pred_region
          _
        $region16: #{tpu_custom_call.1} parent=11 // pred_fallthru
          _
        // Predicated region
        $region17: #{tpu_custom_call.1} parent=11 // pred_check
          %p184 = pneg %p96
        $region18: #{tpu_custom_call.1} parent=11 // pred_check_branch
          %186 = sbr.rel (%p184) target = $region20
        $region19: #{tpu_custom_call.1} parent=11 // pred_region
          _
        $region20: #{tpu_custom_call.1} parent=11 // pred_fallthru
          _
        // Predicated region
        $region21: #{tpu_custom_call.1} parent=11 // pred_check
          %p187 = pneg %p117
        $region22: #{tpu_custom_call.1} parent=11 // pred_check_branch
          %189 = sbr.rel (%p187) target = $region24
        $region23: #{tpu_custom_call.1} parent=11 // pred_region
          _
        $region24: #{tpu_custom_call.1} parent=11 // pred_fallthru
          _
        // Predicated region
        $region25: #{tpu_custom_call.1} parent=11 // pred_check
          %p190 = pneg %p138
        $region26: #{tpu_custom_call.1} parent=11 // pred_check_branch
          %192 = sbr.rel (%p190) target = $region28
        $region27: #{tpu_custom_call.1} parent=11 // pred_region
          _
        $region28: #{tpu_custom_call.1} parent=11 // pred_fallthru
          _
      $region12: #{tpu_custom_call.1} parent=5 // pred_fallthru
        _
      %p193 = scmp.lt.s32.totalorder %s14, 4
      // Predicated region
      $region29: #{tpu_custom_call.1} parent=5 // pred_check
        %p194 = pneg %p193
      $region30: #{tpu_custom_call.1} parent=5 // pred_check_branch
        %196 = sbr.rel (%p194) target = $region32
      $region31: #{tpu_custom_call.1} parent=5 // pred_region
        // Predicated region
        $region33: #{tpu_custom_call.1} parent=31 // pred_check
          %p197 = pneg %p48
        $region34: #{tpu_custom_call.1} parent=31 // pred_check_branch
          %199 = sbr.rel (%p197) target = $region36
        $region35: #{tpu_custom_call.1} parent=31 // pred_region
          %s200 = sand.u32 %s38, 1
          %s201 = sand.u32 %s38, 1
          %s202 = smul.addr %s201, 16
          %s203 = scalar_lea.vmem [#allocation2], %s202
          %s204 = smul.addr %s21, 4
          %s205 = sadd.s32 %s22, %s204
          %s206 = smul.addr %s205, 8
          %s207 = scalar_lea.vmem %s0, %s206
          // Predicated region
          $region37: #{tpu_custom_call.1} parent=35 // pred_check
            _
          $region38: #{tpu_custom_call.1} parent=35 // pred_check_branch
            %209 = sbr.rel (0) target = $region40
          $region39: #{tpu_custom_call.1} parent=35 // pred_region
            // Predicated region
            $region41: #{tpu_custom_call.1} parent=39 // pred_check
              _
            $region42: #{tpu_custom_call.1} parent=39 // pred_check_branch
              %211 = sbr.rel (0) target = $region44
            $region43: #{tpu_custom_call.1} parent=39 // pred_region
              // Predicated region
              $region56: #{tpu_custom_call.1} parent=43 // pred_check
                _
              $region57: #{tpu_custom_call.1} parent=43 // pred_check_branch
                %229 = sbr.rel (0) target = $region59
              $region58: #{tpu_custom_call.1} parent=43 // pred_region
                loop: start=0, step=1, limit=1
                $region60: #{tpu_custom_call.1} parent=58 // loop_pre_header
                  _
                $region61: #{tpu_custom_call.1} parent=58 // loop_header
                  %s231 = sphi 0, %s235
                  %p232 = scmp.ge.s32.totalorder %s231, 1
                  %s236 = sphi %s207, %s207
                  %s237 = sphi %s203, %s203
                $region62: #{tpu_custom_call.1} parent=58 // loop_header_branch
                  %234 = sbr.rel (%p232) target = $region66
                $region63: #{tpu_custom_call.1} parent=58 // loop_body
                  %v238 = vld [vmem:[%s236] sm:$0xff]
                  %239 = vst [vmem:[%s237] sm:$0xff] %v238
                  %v240 = vld [vmem:[%s236 + $0x10] sm:$0xff]
                  %241 = vst [vmem:[%s237 + $0x8] sm:$0xff] %v240
                $region64: #{tpu_custom_call.1} parent=58 // loop_footer
                  %s235 = sadd.s32 1, %s231
                $region65: #{tpu_custom_call.1} parent=58 // loop_footer_branch
                  %230 = sbr.rel target = $region61
                $region66: #{tpu_custom_call.1} parent=58 // loop_exit
                  _
              $region59: #{tpu_custom_call.1} parent=43 // pred_fallthru
                _
              // Predicated region
              $region67: #{tpu_custom_call.1} parent=43 // pred_check
                _
              $region68: #{tpu_custom_call.1} parent=43 // pred_check_branch
                %243 = sbr.rel target = $region70
              $region69: #{tpu_custom_call.1} parent=43 // pred_region
                _
              $region70: #{tpu_custom_call.1} parent=43 // pred_fallthru
                _
            $region44: #{tpu_custom_call.1} parent=39 // pred_fallthru
              _
            // Predicated region
            $region45: #{tpu_custom_call.1} parent=39 // pred_check
              _
            $region46: #{tpu_custom_call.1} parent=39 // pred_check_branch
              %213 = sbr.rel target = $region48
            $region47: #{tpu_custom_call.1} parent=39 // pred_region
              %s215 = ssub.s32 256, 1
              loop: start=0, step=1, limit=1
              $region49: #{tpu_custom_call.1} parent=47 // loop_pre_header
                _
              $region50: #{tpu_custom_call.1} parent=47 // loop_header
                %s217 = sphi 0, %s221
                %p218 = scmp.ge.s32.totalorder %s217, 1
                %s222 = sphi %s207, %s207
                %s223 = sphi %s203, %s203
              $region51: #{tpu_custom_call.1} parent=47 // loop_header_branch
                %220 = sbr.rel (%p218) target = $region55
              $region52: #{tpu_custom_call.1} parent=47 // loop_body
                %v224 = vld [vmem:[%s222] sm:%s215]
                %225 = vst [vmem:[%s223] sm:%s215] %v224
                %v226 = vld [vmem:[%s222 + $0x10] sm:%s215]
                %227 = vst [vmem:[%s223 + $0x8] sm:%s215] %v226
              $region53: #{tpu_custom_call.1} parent=47 // loop_footer
                %s221 = sadd.s32 1, %s217
              $region54: #{tpu_custom_call.1} parent=47 // loop_footer_branch
                %216 = sbr.rel target = $region50
              $region55: #{tpu_custom_call.1} parent=47 // loop_exit
                _
            $region48: #{tpu_custom_call.1} parent=39 // pred_fallthru
              _
          $region40: #{tpu_custom_call.1} parent=35 // pred_fallthru
            _
          %244 = vnop
        $region36: #{tpu_custom_call.1} parent=31 // pred_fallthru
          _
      $region32: #{tpu_custom_call.1} parent=5 // pred_fallthru
        _
      %p245 = scmp.le.s32.totalorder 1, %s14
      %p246 = scmp.lt.s32.totalorder %s14, 5
      %p247 = pnand %p245, %p246
      %p248 = pneg %p247
      // Predicated region
      $region71: #{tpu_custom_call.1} parent=5 // pred_check
        _
      $region72: #{tpu_custom_call.1} parent=5 // pred_check_branch
        %250 = sbr.rel (%p247) target = $region74
      $region73: #{tpu_custom_call.1} parent=5 // pred_region
        %s251 = ssub.s32 %s14, 1
        %s252 = sand.u32 %s41, 1
        %s253 = sand.u32 %s41, 1
        %s254 = smul.addr %s253, 16
        %s255 = scalar_lea.vmem [#allocation2], %s254
        // Predicated region
        $region75: #{tpu_custom_call.1} parent=73 // pred_check
          %p256 = pneg %p54
        $region76: #{tpu_custom_call.1} parent=73 // pred_check_branch
          %258 = sbr.rel (%p256) target = $region78
        $region77: #{tpu_custom_call.1} parent=73 // pred_region
          _
        $region78: #{tpu_custom_call.1} parent=73 // pred_fallthru
          _
        %s259 = sand.u32 %s41, 1
        %s260 = sand.u32 %s41, 1
        %s261 = smul.addr %s260, 16
        %s262 = scalar_lea.vmem [#allocation2], %s261
        %p263 = pneg %p54
        %p264 = pneg %p51
        %p265 = pneg %p75
        %p266 = pneg %p72
        %p267 = pneg %p96
        %p268 = pneg %p93
        %p269 = pneg %p117
        %p270 = pneg %p114
        %p271 = pneg %p138
        %p272 = pneg %p135
        %p273 = pneg %p166
        %p274 = pneg %p163
        %s275 = sand.u32 %s153, 1
        %s276 = scalar_lea.sflag [#allocation4], %s275
        %s277 = sand.u32 %s153, 1
        %s278 = smul.addr %s277, 16
        %s279 = scalar_lea.vmem [#allocation3], %s278
        %v280 = vld [vmem:[%s1] sm:$0xff]
        %v281 = vld [vmem:[%s1 + $0x8] sm:$0xff]
        %v282 = vld [vmem:[%s1 + $0x10] sm:$0xff]
        %v283 = vld [vmem:[%s1 + $0x18] sm:$0xff]
        %v284 = vld [vmem:[%s1 + $0x20] sm:$0xff]
        %v285 = vld [vmem:[%s1 + $0x28] sm:$0xff]
        %v286 = vld [vmem:[%s1 + $0x30] sm:$0xff]
        %v287 = vld [vmem:[%s1 + $0x38] sm:$0xff]
        %v288 = vld [vmem:[%s1 + $0x40] sm:$0xff]
        %v289 = vld [vmem:[%s1 + $0x48] sm:$0xff]
        %v290 = vld [vmem:[%s1 + $0x50] sm:$0xff]
        %v291 = vld [vmem:[%s1 + $0x58] sm:$0xff]
        %v292 = vld [vmem:[%s1 + $0x60] sm:$0xff]
        %v293 = vld [vmem:[%s1 + $0x68] sm:$0xff]
        %v294 = vld [vmem:[%s1 + $0x70] sm:$0xff]
        %v295 = vld [vmem:[%s1 + $0x78] sm:$0xff]
        %v296 = vld [vmem:[%s1 + $0x80] sm:$0xff]
        %v297 = vld [vmem:[%s1 + $0x88] sm:$0xff]
        %v298 = vld [vmem:[%s1 + $0x90] sm:$0xff]
        %v299 = vld [vmem:[%s1 + $0x98] sm:$0xff]
        %v300 = vld [vmem:[%s1 + $0xa0] sm:$0xff]
        %v301 = vld [vmem:[%s1 + $0xa8] sm:$0xff]
        %v302 = vld [vmem:[%s1 + $0xb0] sm:$0xff]
        %v303 = vld [vmem:[%s1 + $0xb8] sm:$0xff]
        %v304 = vld [vmem:[%s1 + $0xc0] sm:$0xff]
        %v305 = vld [vmem:[%s1 + $0xc8] sm:$0xff]
        %v306 = vld [vmem:[%s1 + $0xd0] sm:$0xff]
        %v307 = vld [vmem:[%s1 + $0xd8] sm:$0xff]
        %v308 = vld [vmem:[%s1 + $0xe0] sm:$0xff]
        %v309 = vld [vmem:[%s1 + $0xe8] sm:$0xff]
        %v310 = vld [vmem:[%s1 + $0xf0] sm:$0xff]
        %v311 = vld [vmem:[%s1 + $0xf8] sm:$0xff]
        %v312 = vld [vmem:[%s255] sm:$0xff]
        %v313 = vld [vmem:[%s255 + $0x8] sm:$0xff]
        %v314 = vld [vmem:[%s2] sm:$0xff]
        %v315 = vld [vmem:[%s2 + $0x8] sm:$0xff]
        %v316 = vld [vmem:[%s2 + $0x10] sm:$0xff]
        %v317 = vld [vmem:[%s2 + $0x18] sm:$0xff]
        %v318 = vld [vmem:[%s2 + $0x20] sm:$0xff]
        %v319 = vld [vmem:[%s2 + $0x28] sm:$0xff]
        %v320 = vld [vmem:[%s2 + $0x30] sm:$0xff]
        %v321 = vld [vmem:[%s2 + $0x38] sm:$0xff]
        %v322 = vld [vmem:[%s2 + $0x40] sm:$0xff]
        %v323 = vld [vmem:[%s2 + $0x48] sm:$0xff]
        %v324 = vld [vmem:[%s2 + $0x50] sm:$0xff]
        %v325 = vld [vmem:[%s2 + $0x58] sm:$0xff]
        %v326 = vld [vmem:[%s2 + $0x60] sm:$0xff]
        %v327 = vld [vmem:[%s2 + $0x68] sm:$0xff]
        %v328 = vld [vmem:[%s2 + $0x70] sm:$0xff]
        %v329 = vld [vmem:[%s2 + $0x78] sm:$0xff]
        %v330 = vld [vmem:[%s2 + $0x80] sm:$0xff]
        %v331 = vld [vmem:[%s2 + $0x88] sm:$0xff]
        %v332 = vld [vmem:[%s2 + $0x90] sm:$0xff]
        %v333 = vld [vmem:[%s2 + $0x98] sm:$0xff]
        %v334 = vld [vmem:[%s2 + $0xa0] sm:$0xff]
        %v335 = vld [vmem:[%s2 + $0xa8] sm:$0xff]
        %v336 = vld [vmem:[%s2 + $0xb0] sm:$0xff]
        %v337 = vld [vmem:[%s2 + $0xb8] sm:$0xff]
        %v338 = vld [vmem:[%s2 + $0xc0] sm:$0xff]
        %v339 = vld [vmem:[%s2 + $0xc8] sm:$0xff]
        %v340 = vld [vmem:[%s2 + $0xd0] sm:$0xff]
        %v341 = vld [vmem:[%s2 + $0xd8] sm:$0xff]
        %v342 = vld [vmem:[%s2 + $0xe0] sm:$0xff]
        %v343 = vld [vmem:[%s2 + $0xe8] sm:$0xff]
        %v344 = vld [vmem:[%s2 + $0xf0] sm:$0xff]
        %v345 = vld [vmem:[%s2 + $0xf8] sm:$0xff]
        %347 = vset.pattern.permute.xlu0 0
        %348 = vperm.xlu0 %347, %v314
        %v349 = vpop.permute.xlu0 %348
        %352 = vset.pattern.permute.xlu0 0
        %353 = vperm.xlu0 %352, %v315
        %v354 = vpop.permute.xlu0 %353
        %357 = vset.pattern.permute.xlu0 0
        %358 = vperm.xlu0 %357, %v316
        %v359 = vpop.permute.xlu0 %358
        %362 = vset.pattern.permute.xlu0 0
        %363 = vperm.xlu0 %362, %v317
        %v364 = vpop.permute.xlu0 %363
        %367 = vset.pattern.permute.xlu0 0
        %368 = vperm.xlu0 %367, %v318
        %v369 = vpop.permute.xlu0 %368
        %372 = vset.pattern.permute.xlu0 0
        %373 = vperm.xlu0 %372, %v319
        %v374 = vpop.permute.xlu0 %373
        %377 = vset.pattern.permute.xlu0 0
        %378 = vperm.xlu0 %377, %v320
        %v379 = vpop.permute.xlu0 %378
        %382 = vset.pattern.permute.xlu0 0
        %383 = vperm.xlu0 %382, %v321
        %v384 = vpop.permute.xlu0 %383
        %387 = vset.pattern.permute.xlu0 0
        %388 = vperm.xlu0 %387, %v322
        %v389 = vpop.permute.xlu0 %388
        %392 = vset.pattern.permute.xlu0 0
        %393 = vperm.xlu0 %392, %v323
        %v394 = vpop.permute.xlu0 %393
        %397 = vset.pattern.permute.xlu0 0
        %398 = vperm.xlu0 %397, %v324
        %v399 = vpop.permute.xlu0 %398
        %402 = vset.pattern.permute.xlu0 0
        %403 = vperm.xlu0 %402, %v325
        %v404 = vpop.permute.xlu0 %403
        %407 = vset.pattern.permute.xlu0 0
        %408 = vperm.xlu0 %407, %v326
        %v409 = vpop.permute.xlu0 %408
        %412 = vset.pattern.permute.xlu0 0
        %413 = vperm.xlu0 %412, %v327
        %v414 = vpop.permute.xlu0 %413
        %417 = vset.pattern.permute.xlu0 0
        %418 = vperm.xlu0 %417, %v328
        %v419 = vpop.permute.xlu0 %418
        %422 = vset.pattern.permute.xlu0 0
        %423 = vperm.xlu0 %422, %v329
        %v424 = vpop.permute.xlu0 %423
        %427 = vset.pattern.permute.xlu0 0
        %428 = vperm.xlu0 %427, %v330
        %v429 = vpop.permute.xlu0 %428
        %432 = vset.pattern.permute.xlu0 0
        %433 = vperm.xlu0 %432, %v331
        %v434 = vpop.permute.xlu0 %433
        %437 = vset.pattern.permute.xlu0 0
        %438 = vperm.xlu0 %437, %v332
        %v439 = vpop.permute.xlu0 %438
        %442 = vset.pattern.permute.xlu0 0
        %443 = vperm.xlu0 %442, %v333
        %v444 = vpop.permute.xlu0 %443
        %447 = vset.pattern.permute.xlu0 0
        %448 = vperm.xlu0 %447, %v334
        %v449 = vpop.permute.xlu0 %448
        %452 = vset.pattern.permute.xlu0 0
        %453 = vperm.xlu0 %452, %v335
        %v454 = vpop.permute.xlu0 %453
        %457 = vset.pattern.permute.xlu0 0
        %458 = vperm.xlu0 %457, %v336
        %v459 = vpop.permute.xlu0 %458
        %462 = vset.pattern.permute.xlu0 0
        %463 = vperm.xlu0 %462, %v337
        %v464 = vpop.permute.xlu0 %463
        %467 = vset.pattern.permute.xlu0 0
        %468 = vperm.xlu0 %467, %v338
        %v469 = vpop.permute.xlu0 %468
        %472 = vset.pattern.permute.xlu0 0
        %473 = vperm.xlu0 %472, %v339
        %v474 = vpop.permute.xlu0 %473
        %477 = vset.pattern.permute.xlu0 0
        %478 = vperm.xlu0 %477, %v340
        %v479 = vpop.permute.xlu0 %478
        %482 = vset.pattern.permute.xlu0 0
        %483 = vperm.xlu0 %482, %v341
        %v484 = vpop.permute.xlu0 %483
        %487 = vset.pattern.permute.xlu0 0
        %488 = vperm.xlu0 %487, %v342
        %v489 = vpop.permute.xlu0 %488
        %492 = vset.pattern.permute.xlu0 0
        %493 = vperm.xlu0 %492, %v343
        %v494 = vpop.permute.xlu0 %493
        %497 = vset.pattern.permute.xlu0 0
        %498 = vperm.xlu0 %497, %v344
        %v499 = vpop.permute.xlu0 %498
        %502 = vset.pattern.permute.xlu0 0
        %503 = vperm.xlu0 %502, %v345
        %v504 = vpop.permute.xlu0 %503
        %vm506 = vcmask 130048
        %v508 = vsel %vm506, %v280, 0
        %v511 = vsel %vm506, %v281, 0
        %v514 = vsel %vm506, %v282, 0
        %v517 = vsel %vm506, %v283, 0
        %v520 = vsel %vm506, %v284, 0
        %v523 = vsel %vm506, %v285, 0
        %v526 = vsel %vm506, %v286, 0
        %v529 = vsel %vm506, %v287, 0
        %v532 = vsel %vm506, %v288, 0
        %v535 = vsel %vm506, %v289, 0
        %v538 = vsel %vm506, %v290, 0
        %v541 = vsel %vm506, %v291, 0
        %v544 = vsel %vm506, %v292, 0
        %v547 = vsel %vm506, %v293, 0
        %v550 = vsel %vm506, %v294, 0
        %v553 = vsel %vm506, %v295, 0
        %v556 = vsel %vm506, %v296, 0
        %v559 = vsel %vm506, %v297, 0
        %v562 = vsel %vm506, %v298, 0
        %v565 = vsel %vm506, %v299, 0
        %v568 = vsel %vm506, %v300, 0
        %v571 = vsel %vm506, %v301, 0
        %v574 = vsel %vm506, %v302, 0
        %v577 = vsel %vm506, %v303, 0
        %v580 = vsel %vm506, %v304, 0
        %v583 = vsel %vm506, %v305, 0
        %v586 = vsel %vm506, %v306, 0
        %v589 = vsel %vm506, %v307, 0
        %v592 = vsel %vm506, %v308, 0
        %v595 = vsel %vm506, %v309, 0
        %v598 = vsel %vm506, %v310, 0
        %v601 = vsel %vm506, %v311, 0
        %603 = vmatprep.subr.mxu0 0.0
        %604 = vmatpush1.msra.mxu0 0.0
        %605 = vmatprep.subr.mxu0 0.0
        %606 = vmatpush1.msra.mxu0 0.0
        %607 = vmatprep.subr.mxu0 0.0
        %608 = vmatpush1.msra.mxu0 0.0
        %609 = vmatprep.subr.mxu0 0.0
        %610 = vmatpush1.msra.mxu0 0.0
        %611 = vmatprep.subr.mxu0 0.0
        %612 = vmatpush1.msra.mxu0 0.0
        %613 = vmatprep.subr.mxu0 0.0
        %614 = vmatpush1.msra.mxu0 0.0
        %615 = vmatprep.subr.mxu0 0.0
        %616 = vmatpush1.msra.mxu0 0.0
        %617 = vmatprep.subr.mxu0 0.0
        %618 = vmatpush1.msra.mxu0 0.0
        %619 = vmatprep.subr.mxu0 0.0
        %620 = vmatpush1.msra.mxu0 0.0
        %621 = vmatprep.subr.mxu0 0.0
        %622 = vmatpush1.msra.mxu0 0.0
        %623 = vmatprep.subr.mxu0 0.0
        %624 = vmatpush1.msra.mxu0 0.0
        %625 = vmatprep.subr.mxu0 0.0
        %626 = vmatpush1.msra.mxu0 0.0
        %627 = vmatprep.subr.mxu0 0.0
        %628 = vmatpush1.msra.mxu0 0.0
        %629 = vmatprep.subr.mxu0 0.0
        %630 = vmatpush1.msra.mxu0 0.0
        %631 = vmatprep.subr.mxu0 0.0
        %632 = vmatpush1.msra.mxu0 %v313
        %633 = vmatprep.subr.mxu0 0.0
        %634 = vmatpush1.msra.mxu0 %v312
        %635 = vmatprep.subr.mxu0 0.0
        %636 = vmatpush2.msra.mxu0 0.0
        %637 = vmatprep.subr.mxu0 0.0
        %638 = vmatpush2.msra.mxu0 0.0
        %639 = vmatprep.subr.mxu0 0.0
        %640 = vmatpush2.msra.mxu0 0.0
        %641 = vmatprep.subr.mxu0 0.0
        %642 = vmatpush2.msra.mxu0 0.0
        %643 = vmatprep.subr.mxu0 0.0
        %644 = vmatpush2.msra.mxu0 0.0
        %645 = vmatprep.subr.mxu0 0.0
        %646 = vmatpush2.msra.mxu0 0.0
        %647 = vmatprep.subr.mxu0 0.0
        %648 = vmatpush2.msra.mxu0 0.0
        %649 = vmatprep.subr.mxu0 0.0
        %650 = vmatpush2.msra.mxu0 0.0
        %651 = vmatprep.subr.mxu0 0.0
        %652 = vmatpush2.msra.mxu0 0.0
        %653 = vmatprep.subr.mxu0 0.0
        %654 = vmatpush2.msra.mxu0 0.0
        %655 = vmatprep.subr.mxu0 0.0
        %656 = vmatpush2.msra.mxu0 0.0
        %657 = vmatprep.subr.mxu0 0.0
        %658 = vmatpush2.msra.mxu0 0.0
        %659 = vmatprep.subr.mxu0 0.0
        %660 = vmatpush2.msra.mxu0 0.0
        %661 = vmatprep.subr.mxu0 0.0
        %662 = vmatpush2.msra.mxu0 0.0
        %663 = vmatprep.subr.mxu0 0.0
        %664 = vmatpush2.msra.mxu0 0.0
        %665 = vmatprep.subr.mxu0 0.0
        %666 = vmatpush2.msra.mxu0 0.0
        %667 = vmatprep.mubr.f32.mxu0 0.0
        %668 = vmatmul.mubr.f32.gmra.mxu0 %v508
        %v669 = vpop.f32.mrf.mxu0
        %v670 = vadd.f32 %v349, %v669
        %v671 = vpop.f32.mrf.mxu0
        %672 = vmatprep.mubr.f32.mxu0 0.0
        %673 = vmatmul.mubr.f32.gmra.mxu0 %v511
        %v674 = vpop.f32.mrf.mxu0
        %v675 = vadd.f32 %v354, %v674
        %v676 = vpop.f32.mrf.mxu0
        %677 = vmatprep.mubr.f32.mxu0 0.0
        %678 = vmatmul.mubr.f32.gmra.mxu0 %v514
        %v679 = vpop.f32.mrf.mxu0
        %v680 = vadd.f32 %v359, %v679
        %v681 = vpop.f32.mrf.mxu0
        %682 = vmatprep.mubr.f32.mxu0 0.0
        %683 = vmatmul.mubr.f32.gmra.mxu0 %v517
        %v684 = vpop.f32.mrf.mxu0
        %v685 = vadd.f32 %v364, %v684
        %v686 = vpop.f32.mrf.mxu0
        %687 = vmatprep.mubr.f32.mxu0 0.0
        %688 = vmatmul.mubr.f32.gmra.mxu0 %v520
        %v689 = vpop.f32.mrf.mxu0
        %v690 = vadd.f32 %v369, %v689
        %v691 = vpop.f32.mrf.mxu0
        %692 = vmatprep.mubr.f32.mxu0 0.0
        %693 = vmatmul.mubr.f32.gmra.mxu0 %v523
        %v694 = vpop.f32.mrf.mxu0
        %v695 = vadd.f32 %v374, %v694
        %v696 = vpop.f32.mrf.mxu0
        %697 = vmatprep.mubr.f32.mxu0 0.0
        %698 = vmatmul.mubr.f32.gmra.mxu0 %v526
        %v699 = vpop.f32.mrf.mxu0
        %v700 = vadd.f32 %v379, %v699
        %v701 = vpop.f32.mrf.mxu0
        %702 = vmatprep.mubr.f32.mxu0 0.0
        %703 = vmatmul.mubr.f32.gmra.mxu0 %v529
        %v704 = vpop.f32.mrf.mxu0
        %v705 = vadd.f32 %v384, %v704
        %v706 = vpop.f32.mrf.mxu0
        %707 = vmatprep.mubr.f32.mxu0 0.0
        %708 = vmatmul.mubr.f32.gmra.mxu0 %v532
        %v709 = vpop.f32.mrf.mxu0
        %v710 = vadd.f32 %v389, %v709
        %v711 = vpop.f32.mrf.mxu0
        %712 = vmatprep.mubr.f32.mxu0 0.0
        %713 = vmatmul.mubr.f32.gmra.mxu0 %v535
        %v714 = vpop.f32.mrf.mxu0
        %v715 = vadd.f32 %v394, %v714
        %v716 = vpop.f32.mrf.mxu0
        %717 = vmatprep.mubr.f32.mxu0 0.0
        %718 = vmatmul.mubr.f32.gmra.mxu0 %v538
        %v719 = vpop.f32.mrf.mxu0
        %v720 = vadd.f32 %v399, %v719
        %v721 = vpop.f32.mrf.mxu0
        %722 = vmatprep.mubr.f32.mxu0 0.0
        %723 = vmatmul.mubr.f32.gmra.mxu0 %v541
        %v724 = vpop.f32.mrf.mxu0
        %v725 = vadd.f32 %v404, %v724
        %v726 = vpop.f32.mrf.mxu0
        %727 = vmatprep.mubr.f32.mxu0 0.0
        %728 = vmatmul.mubr.f32.gmra.mxu0 %v544
        %v729 = vpop.f32.mrf.mxu0
        %v730 = vadd.f32 %v409, %v729
        %v731 = vpop.f32.mrf.mxu0
        %732 = vmatprep.mubr.f32.mxu0 0.0
        %733 = vmatmul.mubr.f32.gmra.mxu0 %v547
        %v734 = vpop.f32.mrf.mxu0
        %v735 = vadd.f32 %v414, %v734
        %v736 = vpop.f32.mrf.mxu0
        %737 = vmatprep.mubr.f32.mxu0 0.0
        %738 = vmatmul.mubr.f32.gmra.mxu0 %v550
        %v739 = vpop.f32.mrf.mxu0
        %v740 = vadd.f32 %v419, %v739
        %v741 = vpop.f32.mrf.mxu0
        %742 = vmatprep.mubr.f32.mxu0 0.0
        %743 = vmatmul.mubr.f32.gmra.mxu0 %v553
        %v744 = vpop.f32.mrf.mxu0
        %v745 = vadd.f32 %v424, %v744
        %v746 = vpop.f32.mrf.mxu0
        %747 = vmatprep.mubr.f32.mxu0 0.0
        %748 = vmatmul.mubr.f32.gmra.mxu0 %v556
        %v749 = vpop.f32.mrf.mxu0
        %v750 = vadd.f32 %v429, %v749
        %v751 = vpop.f32.mrf.mxu0
        %752 = vmatprep.mubr.f32.mxu0 0.0
        %753 = vmatmul.mubr.f32.gmra.mxu0 %v559
        %v754 = vpop.f32.mrf.mxu0
        %v755 = vadd.f32 %v434, %v754
        %v756 = vpop.f32.mrf.mxu0
        %757 = vmatprep.mubr.f32.mxu0 0.0
        %758 = vmatmul.mubr.f32.gmra.mxu0 %v562
        %v759 = vpop.f32.mrf.mxu0
        %v760 = vadd.f32 %v439, %v759
        %v761 = vpop.f32.mrf.mxu0
        %762 = vmatprep.mubr.f32.mxu0 0.0
        %763 = vmatmul.mubr.f32.gmra.mxu0 %v565
        %v764 = vpop.f32.mrf.mxu0
        %v765 = vadd.f32 %v444, %v764
        %v766 = vpop.f32.mrf.mxu0
        %767 = vmatprep.mubr.f32.mxu0 0.0
        %768 = vmatmul.mubr.f32.gmra.mxu0 %v568
        %v769 = vpop.f32.mrf.mxu0
        %v770 = vadd.f32 %v449, %v769
        %v771 = vpop.f32.mrf.mxu0
        %772 = vmatprep.mubr.f32.mxu0 0.0
        %773 = vmatmul.mubr.f32.gmra.mxu0 %v571
        %v774 = vpop.f32.mrf.mxu0
        %v775 = vadd.f32 %v454, %v774
        %v776 = vpop.f32.mrf.mxu0
        %777 = vmatprep.mubr.f32.mxu0 0.0
        %778 = vmatmul.mubr.f32.gmra.mxu0 %v574
        %v779 = vpop.f32.mrf.mxu0
        %v780 = vadd.f32 %v459, %v779
        %v781 = vpop.f32.mrf.mxu0
        %782 = vmatprep.mubr.f32.mxu0 0.0
        %783 = vmatmul.mubr.f32.gmra.mxu0 %v577
        %v784 = vpop.f32.mrf.mxu0
        %v785 = vadd.f32 %v464, %v784
        %v786 = vpop.f32.mrf.mxu0
        %787 = vmatprep.mubr.f32.mxu0 0.0
        %788 = vmatmul.mubr.f32.gmra.mxu0 %v580
        %v789 = vpop.f32.mrf.mxu0
        %v790 = vadd.f32 %v469, %v789
        %v791 = vpop.f32.mrf.mxu0
        %792 = vmatprep.mubr.f32.mxu0 0.0
        %793 = vmatmul.mubr.f32.gmra.mxu0 %v583
        %v794 = vpop.f32.mrf.mxu0
        %v795 = vadd.f32 %v474, %v794
        %v796 = vpop.f32.mrf.mxu0
        %797 = vmatprep.mubr.f32.mxu0 0.0
        %798 = vmatmul.mubr.f32.gmra.mxu0 %v586
        %v799 = vpop.f32.mrf.mxu0
        %v800 = vadd.f32 %v479, %v799
        %v801 = vpop.f32.mrf.mxu0
        %802 = vmatprep.mubr.f32.mxu0 0.0
        %803 = vmatmul.mubr.f32.gmra.mxu0 %v589
        %v804 = vpop.f32.mrf.mxu0
        %v805 = vadd.f32 %v484, %v804
        %v806 = vpop.f32.mrf.mxu0
        %807 = vmatprep.mubr.f32.mxu0 0.0
        %808 = vmatmul.mubr.f32.gmra.mxu0 %v592
        %v809 = vpop.f32.mrf.mxu0
        %v810 = vadd.f32 %v489, %v809
        %v811 = vpop.f32.mrf.mxu0
        %812 = vmatprep.mubr.f32.mxu0 0.0
        %813 = vmatmul.mubr.f32.gmra.mxu0 %v595
        %v814 = vpop.f32.mrf.mxu0
        %v815 = vadd.f32 %v494, %v814
        %v816 = vpop.f32.mrf.mxu0
        %817 = vmatprep.mubr.f32.mxu0 0.0
        %818 = vmatmul.mubr.f32.gmra.mxu0 %v598
        %v819 = vpop.f32.mrf.mxu0
        %v820 = vadd.f32 %v499, %v819
        %v821 = vpop.f32.mrf.mxu0
        %822 = vmatprep.mubr.f32.mxu0 0.0
        %823 = vmatmul.mubr.f32.gmra.mxu0 %v601
        %v824 = vpop.f32.mrf.mxu0
        %v825 = vadd.f32 %v504, %v824
        %v826 = vpop.f32.mrf.mxu0
        %827 = vdwg.mxu0
        %v828 = vmul.f32 %v670, 0.5
        %v829 = vmul.f32 %v675, 0.5
        %v830 = vmul.f32 %v680, 0.5
        %v831 = vmul.f32 %v685, 0.5
        %v832 = vmul.f32 %v690, 0.5
        %v833 = vmul.f32 %v695, 0.5
        %v834 = vmul.f32 %v700, 0.5
        %v835 = vmul.f32 %v705, 0.5
        %v836 = vmul.f32 %v710, 0.5
        %v837 = vmul.f32 %v715, 0.5
        %v838 = vmul.f32 %v720, 0.5
        %v839 = vmul.f32 %v725, 0.5
        %v840 = vmul.f32 %v730, 0.5
        %v841 = vmul.f32 %v735, 0.5
        %v842 = vmul.f32 %v740, 0.5
        %v843 = vmul.f32 %v745, 0.5
        %v844 = vmul.f32 %v750, 0.5
        %v845 = vmul.f32 %v755, 0.5
        %v846 = vmul.f32 %v760, 0.5
        %v847 = vmul.f32 %v765, 0.5
        %v848 = vmul.f32 %v770, 0.5
        %v849 = vmul.f32 %v775, 0.5
        %v850 = vmul.f32 %v780, 0.5
        %v851 = vmul.f32 %v785, 0.5
        %v852 = vmul.f32 %v790, 0.5
        %v853 = vmul.f32 %v795, 0.5
        %v854 = vmul.f32 %v800, 0.5
        %v855 = vmul.f32 %v805, 0.5
        %v856 = vmul.f32 %v810, 0.5
        %v857 = vmul.f32 %v815, 0.5
        %v858 = vmul.f32 %v820, 0.5
        %v859 = vmul.f32 %v825, 0.5
        %v860 = vmul.f32 %v670, 0.70710677
        %v861 = vmul.f32 %v675, 0.70710677
        %v862 = vmul.f32 %v680, 0.70710677
        %v863 = vmul.f32 %v685, 0.70710677
        %v864 = vmul.f32 %v690, 0.70710677
        %v865 = vmul.f32 %v695, 0.70710677
        %v866 = vmul.f32 %v700, 0.70710677
        %v867 = vmul.f32 %v705, 0.70710677
        %v868 = vmul.f32 %v710, 0.70710677
        %v869 = vmul.f32 %v715, 0.70710677
        %v870 = vmul.f32 %v720, 0.70710677
        %v871 = vmul.f32 %v725, 0.70710677
        %v872 = vmul.f32 %v730, 0.70710677
        %v873 = vmul.f32 %v735, 0.70710677
        %v874 = vmul.f32 %v740, 0.70710677
        %v875 = vmul.f32 %v745, 0.70710677
        %v876 = vmul.f32 %v750, 0.70710677
        %v877 = vmul.f32 %v755, 0.70710677
        %v878 = vmul.f32 %v760, 0.70710677
        %v879 = vmul.f32 %v765, 0.70710677
        %v880 = vmul.f32 %v770, 0.70710677
        %v881 = vmul.f32 %v775, 0.70710677
        %v882 = vmul.f32 %v780, 0.70710677
        %v883 = vmul.f32 %v785, 0.70710677
        %v884 = vmul.f32 %v790, 0.70710677
        %v885 = vmul.f32 %v795, 0.70710677
        %v886 = vmul.f32 %v800, 0.70710677
        %v887 = vmul.f32 %v805, 0.70710677
        %v888 = vmul.f32 %v810, 0.70710677
        %v889 = vmul.f32 %v815, 0.70710677
        %v890 = vmul.f32 %v820, 0.70710677
        %v891 = vmul.f32 %v825, 0.70710677
        %v892 = verf.f32.pop %v860
        %v893 = verf.f32.pop %v861
        %v894 = verf.f32.pop %v862
        %v895 = verf.f32.pop %v863
        %v896 = verf.f32.pop %v864
        %v897 = verf.f32.pop %v865
        %v898 = verf.f32.pop %v866
        %v899 = verf.f32.pop %v867
        %v900 = verf.f32.pop %v868
        %v901 = verf.f32.pop %v869
        %v902 = verf.f32.pop %v870
        %v903 = verf.f32.pop %v871
        %v904 = verf.f32.pop %v872
        %v905 = verf.f32.pop %v873
        %v906 = verf.f32.pop %v874
        %v907 = verf.f32.pop %v875
        %v908 = verf.f32.pop %v876
        %v909 = verf.f32.pop %v877
        %v910 = verf.f32.pop %v878
        %v911 = verf.f32.pop %v879
        %v912 = verf.f32.pop %v880
        %v913 = verf.f32.pop %v881
        %v914 = verf.f32.pop %v882
        %v915 = verf.f32.pop %v883
        %v916 = verf.f32.pop %v884
        %v917 = verf.f32.pop %v885
        %v918 = verf.f32.pop %v886
        %v919 = verf.f32.pop %v887
        %v920 = verf.f32.pop %v888
        %v921 = verf.f32.pop %v889
        %v922 = verf.f32.pop %v890
        %v923 = verf.f32.pop %v891
        %v924 = vadd.f32 %v892, 1.0
        %v925 = vadd.f32 %v893, 1.0
        %v926 = vadd.f32 %v894, 1.0
        %v927 = vadd.f32 %v895, 1.0
        %v928 = vadd.f32 %v896, 1.0
        %v929 = vadd.f32 %v897, 1.0
        %v930 = vadd.f32 %v898, 1.0
        %v931 = vadd.f32 %v899, 1.0
        %v932 = vadd.f32 %v900, 1.0
        %v933 = vadd.f32 %v901, 1.0
        %v934 = vadd.f32 %v902, 1.0
        %v935 = vadd.f32 %v903, 1.0
        %v936 = vadd.f32 %v904, 1.0
        %v937 = vadd.f32 %v905, 1.0
        %v938 = vadd.f32 %v906, 1.0
        %v939 = vadd.f32 %v907, 1.0
        %v940 = vadd.f32 %v908, 1.0
        %v941 = vadd.f32 %v909, 1.0
        %v942 = vadd.f32 %v910, 1.0
        %v943 = vadd.f32 %v911, 1.0
        %v944 = vadd.f32 %v912, 1.0
        %v945 = vadd.f32 %v913, 1.0
        %v946 = vadd.f32 %v914, 1.0
        %v947 = vadd.f32 %v915, 1.0
        %v948 = vadd.f32 %v916, 1.0
        %v949 = vadd.f32 %v917, 1.0
        %v950 = vadd.f32 %v918, 1.0
        %v951 = vadd.f32 %v919, 1.0
        %v952 = vadd.f32 %v920, 1.0
        %v953 = vadd.f32 %v921, 1.0
        %v954 = vadd.f32 %v922, 1.0
        %v955 = vadd.f32 %v923, 1.0
        %v956 = vmul.f32 %v828, %v924
        %v957 = vmul.f32 %v829, %v925
        %v958 = vmul.f32 %v830, %v926
        %v959 = vmul.f32 %v831, %v927
        %v960 = vmul.f32 %v832, %v928
        %v961 = vmul.f32 %v833, %v929
        %v962 = vmul.f32 %v834, %v930
        %v963 = vmul.f32 %v835, %v931
        %v964 = vmul.f32 %v836, %v932
        %v965 = vmul.f32 %v837, %v933
        %v966 = vmul.f32 %v838, %v934
        %v967 = vmul.f32 %v839, %v935
        %v968 = vmul.f32 %v840, %v936
        %v969 = vmul.f32 %v841, %v937
        %v970 = vmul.f32 %v842, %v938
        %v971 = vmul.f32 %v843, %v939
        %v972 = vmul.f32 %v844, %v940
        %v973 = vmul.f32 %v845, %v941
        %v974 = vmul.f32 %v846, %v942
        %v975 = vmul.f32 %v847, %v943
        %v976 = vmul.f32 %v848, %v944
        %v977 = vmul.f32 %v849, %v945
        %v978 = vmul.f32 %v850, %v946
        %v979 = vmul.f32 %v851, %v947
        %v980 = vmul.f32 %v852, %v948
        %v981 = vmul.f32 %v853, %v949
        %v982 = vmul.f32 %v854, %v950
        %v983 = vmul.f32 %v855, %v951
        %v984 = vmul.f32 %v856, %v952
        %v985 = vmul.f32 %v857, %v953
        %v986 = vmul.f32 %v858, %v954
        %v987 = vmul.f32 %v859, %v955
        %v988 = vld [vmem:[%s3] sm:$0xff]
        %v989 = vld [vmem:[%s3 + $0x8] sm:$0xff]
        %v990 = vld [vmem:[%s3 + $0x10] sm:$0xff]
        %v991 = vld [vmem:[%s3 + $0x18] sm:$0xff]
        %v992 = vld [vmem:[%s4] sm:$0xff]
        %v993 = vld [vmem:[%s4 + $0x8] sm:$0xff]
        %995 = vset.pattern.permute.xlu0 0
        %996 = vperm.xlu0 %995, %v992
        %v997 = vpop.permute.xlu0 %996
        %1000 = vset.pattern.permute.xlu0 0
        %1001 = vperm.xlu0 %1000, %v993
        %v1002 = vpop.permute.xlu0 %1001
        %1004 = vmatprep.subr.mxu0 0.0
        %1005 = vmatpush1.msra.mxu0 %v971
        %1006 = vmatprep.subr.mxu0 0.0
        %1007 = vmatpush1.msra.mxu0 %v970
        %1008 = vmatprep.subr.mxu0 0.0
        %1009 = vmatpush1.msra.mxu0 %v969
        %1010 = vmatprep.subr.mxu0 0.0
        %1011 = vmatpush1.msra.mxu0 %v968
        %1012 = vmatprep.subr.mxu0 0.0
        %1013 = vmatpush1.msra.mxu0 %v967
        %1014 = vmatprep.subr.mxu0 0.0
        %1015 = vmatpush1.msra.mxu0 %v966
        %1016 = vmatprep.subr.mxu0 0.0
        %1017 = vmatpush1.msra.mxu0 %v965
        %1018 = vmatprep.subr.mxu0 0.0
        %1019 = vmatpush1.msra.mxu0 %v964
        %1020 = vmatprep.subr.mxu0 0.0
        %1021 = vmatpush1.msra.mxu0 %v963
        %1022 = vmatprep.subr.mxu0 0.0
        %1023 = vmatpush1.msra.mxu0 %v962
        %1024 = vmatprep.subr.mxu0 0.0
        %1025 = vmatpush1.msra.mxu0 %v961
        %1026 = vmatprep.subr.mxu0 0.0
        %1027 = vmatpush1.msra.mxu0 %v960
        %1028 = vmatprep.subr.mxu0 0.0
        %1029 = vmatpush1.msra.mxu0 %v959
        %1030 = vmatprep.subr.mxu0 0.0
        %1031 = vmatpush1.msra.mxu0 %v958
        %1032 = vmatprep.subr.mxu0 0.0
        %1033 = vmatpush1.msra.mxu0 %v957
        %1034 = vmatprep.subr.mxu0 0.0
        %1035 = vmatpush1.msra.mxu0 %v956
        %1036 = vmatprep.subr.mxu0 0.0
        %1037 = vmatpush2.msra.mxu0 %v987
        %1038 = vmatprep.subr.mxu0 0.0
        %1039 = vmatpush2.msra.mxu0 %v986
        %1040 = vmatprep.subr.mxu0 0.0
        %1041 = vmatpush2.msra.mxu0 %v985
        %1042 = vmatprep.subr.mxu0 0.0
        %1043 = vmatpush2.msra.mxu0 %v984
        %1044 = vmatprep.subr.mxu0 0.0
        %1045 = vmatpush2.msra.mxu0 %v983
        %1046 = vmatprep.subr.mxu0 0.0
        %1047 = vmatpush2.msra.mxu0 %v982
        %1048 = vmatprep.subr.mxu0 0.0
        %1049 = vmatpush2.msra.mxu0 %v981
        %1050 = vmatprep.subr.mxu0 0.0
        %1051 = vmatpush2.msra.mxu0 %v980
        %1052 = vmatprep.subr.mxu0 0.0
        %1053 = vmatpush2.msra.mxu0 %v979
        %1054 = vmatprep.subr.mxu0 0.0
        %1055 = vmatpush2.msra.mxu0 %v978
        %1056 = vmatprep.subr.mxu0 0.0
        %1057 = vmatpush2.msra.mxu0 %v977
        %1058 = vmatprep.subr.mxu0 0.0
        %1059 = vmatpush2.msra.mxu0 %v976
        %1060 = vmatprep.subr.mxu0 0.0
        %1061 = vmatpush2.msra.mxu0 %v975
        %1062 = vmatprep.subr.mxu0 0.0
        %1063 = vmatpush2.msra.mxu0 %v974
        %1064 = vmatprep.subr.mxu0 0.0
        %1065 = vmatpush2.msra.mxu0 %v973
        %1066 = vmatprep.subr.mxu0 0.0
        %1067 = vmatpush2.msra.mxu0 %v972
        %1068 = vmatprep.mubr.f32.mxu0 %v989
        %1069 = vmatmul.mubr.f32.gmra.mxu0 %v988
        %v1070 = vpop.f32.mrf.mxu0
        %v1071 = vadd.f32 %v997, %v1070
        %v1072 = vpop.f32.mrf.mxu0
        %1073 = vmatprep.mubr.f32.mxu0 %v991
        %1074 = vmatmul.mubr.f32.gmra.mxu0 %v990
        %v1075 = vpop.f32.mrf.mxu0
        %v1076 = vadd.f32 %v1002, %v1075
        %v1077 = vpop.f32.mrf.mxu0
        %1078 = vdwg.mxu0
        %1079 = vst [vmem:[%s279] sm:$0xff] %v1071
        %1080 = vst [vmem:[%s279 + $0x8] sm:$0xff] %v1076
        %s1081 = sand.u32 %s153, 1
        %s1082 = scalar_lea.sflag [#allocation4], %s1081
        %s1083 = sand.u32 %s153, 1
        %s1084 = smul.addr %s1083, 16
        %s1085 = scalar_lea.vmem [#allocation3], %s1084
        // Predicated region
        $region79: #{tpu_custom_call.1} parent=73 // pred_check
          %p1086 = pneg %p163
        $region80: #{tpu_custom_call.1} parent=73 // pred_check_branch
          %1088 = sbr.rel (%p1086) target = $region82
        $region81: #{tpu_custom_call.1} parent=73 // pred_region
          %s1090 = ssub.s32 256, 256
          %1091 = vsyncadd %s1082, %s1090
          %s1092 = smul.addr %s23, 4
          %s1093 = sadd.s32 %s24, %s1092
          %s1094 = smul.addr %s1093, 128
          %s1095 = scalar_lea.hbm %s5, %s1094
          %s1096 = sshll.u32 %s1085, 4
          %s1097 = int_to_ptr.vmem [resolvable:$true] %s1096
          %1102 = dma.vmem_to_hbm [thread:$0]  %s1097, 256, %s1095, %s1082, 128, 256, 8
        $region82: #{tpu_custom_call.1} parent=73 // pred_fallthru
          _
      $region74: #{tpu_custom_call.1} parent=5 // pred_fallthru
        _
      %p1103 = scmp.le.s32.totalorder 2, %s14
      // Predicated region
      $region83: #{tpu_custom_call.1} parent=5 // pred_check
        %p1104 = pneg %p1103
      $region84: #{tpu_custom_call.1} parent=5 // pred_check_branch
        %1106 = sbr.rel (%p1104) target = $region86
      $region85: #{tpu_custom_call.1} parent=5 // pred_region
        %s1107 = ssub.s32 %s14, 2
        // Predicated region
        $region87: #{tpu_custom_call.1} parent=85 // pred_check
          %p1108 = pneg %p169
        $region88: #{tpu_custom_call.1} parent=85 // pred_check_branch
          %1110 = sbr.rel (%p1108) target = $region90
        $region89: #{tpu_custom_call.1} parent=85 // pred_region
          %s1111 = sand.u32 %s154, 1
          %s1112 = scalar_lea.sflag [#allocation4], %s1111
          %s1113 = sand.u32 %s154, 1
          %s1114 = smul.addr %s1113, 16
          %s1115 = scalar_lea.vmem [#allocation3], %s1114
          %1116 = dma.done %s1112, 256
        $region90: #{tpu_custom_call.1} parent=85 // pred_fallthru
          _
      $region86: #{tpu_custom_call.1} parent=5 // pred_fallthru
        _
    $region6: #{tpu_custom_call.1} parent=1 // loop_footer
      %s18 = sadd.s32 1, %s14
    $region7: #{tpu_custom_call.1} parent=1 // loop_footer_branch
      %13 = sbr.rel target = $region3
    $region8: #{tpu_custom_call.1} parent=1 // loop_exit
      _
    %1117 = vsyncpa [#allocation4], 1
    %s1118 = scalar_lea.sflag [#allocation4], 1
    %1119 = vsyncpa %s1118, 1

</llo_original>
